<compile_context>
chip_gen: v6e
topology: v6e:2x2x1
jax: 0.10.0
libtpu: 0.0.40
codegen_flags: <defaults>
</compile_context>

<pallas_src>
import functools

import jax
import jax.numpy as jnp
from jax.experimental import pallas as pl
from jax.experimental.pallas import tpu as pltpu

LANE = 128     # TPU lane width (last dim)
SUBLANE = 8    # TPU sublane width (second-to-last dim, f32)
MAX_TM = 512   # max batch-tile rows


def _round_up(v, m):
    return ((v + m - 1) // m) * m


def ae_forward_kernel(x_ref,
                      w1_ref, b1_ref,
                      w2_ref, b2_ref,
                      w3_ref, b3_ref,
                      w4_ref, b4_ref,
                      xbar_ref, enc_ref, z_ref):
    """Fused 4-layer MLP forward for one batch tile.

    MXU matmuls accumulate in f32 (preferred_element_type); bias-add and ReLU
    run in f32 on the VPU.  Weights may be bf16 (operands cast right before
    each dot); biases are always f32."""
    x = x_ref[...]  # already in the weight/compute dtype (cast in the wrapper)

    h1 = jnp.dot(x, w1_ref[...], preferred_element_type=jnp.float32) + b1_ref[...]
    h1 = jnp.maximum(h1, 0.0)
    enc_ref[...] = h1.astype(enc_ref.dtype)

    z = jnp.dot(h1.astype(w2_ref.dtype), w2_ref[...],
                preferred_element_type=jnp.float32) + b2_ref[...]
    z_ref[...] = z.astype(z_ref.dtype)

    d1 = jnp.dot(z.astype(w3_ref.dtype), w3_ref[...],
                 preferred_element_type=jnp.float32) + b3_ref[...]
    d1 = jnp.maximum(d1, 0.0)

    xb = jnp.dot(d1.astype(w4_ref.dtype), w4_ref[...],
                 preferred_element_type=jnp.float32) + b4_ref[...]
    xbar_ref[...] = xb.astype(xbar_ref.dtype)


def prepare_params(params, compute_dtype=jnp.float32):
    """One-time weight prep (keep the result around between forward calls):
       - transpose PyTorch [out, in] -> [in, out]
       - zero-pad every feature dim to a multiple of 128 (lane-dense)
       - cast weights to compute_dtype (bf16 recommended on v6e/v7x)
       - biases stay f32, shaped (1, out_padded) for sublane broadcast."""
    w1, b1 = params["enc_1"]
    w2, b2 = params["class_layer"]
    w3, b3 = params["dec_1"]
    w4, b4 = params["x_bar_layer"]

    n_input = w1.shape[1]
    n_enc_1 = w1.shape[0]
    n_hidden = w2.shape[0]
    n_dec_1 = w3.shape[0]
    dims = (n_input, n_enc_1, n_hidden, n_dec_1)

    def pad_w(w):  # [out, in] -> padded [in_p, out_p], compute dtype
        out_f, in_f = w.shape
        wt = jnp.pad(w.T, ((0, _round_up(in_f, LANE) - in_f),
                           (0, _round_up(out_f, LANE) - out_f)))
        return wt.astype(compute_dtype)

    def pad_b(b):  # [out] -> padded (1, out_p), f32
        out_f = b.shape[0]
        bp = jnp.pad(b, (0, _round_up(out_f, LANE) - out_f))
        return bp.astype(jnp.float32).reshape(1, -1)

    prepped = (pad_w(w1), pad_b(b1), pad_w(w2), pad_b(b2),
               pad_w(w3), pad_b(b3), pad_w(w4), pad_b(b4))
    return prepped, dims


def _pick_batch_tile(n):
    """Largest sublane-aligned tile <= MAX_TM that minimizes padded rows."""
    n_al = _round_up(max(n, 1), SUBLANE)
    if n_al <= MAX_TM:
        return n_al, n_al                      # single tile, minimal padding
    g = -(-n_al // MAX_TM)                     # number of tiles
    tm = _round_up(-(-n_al // g), SUBLANE)     # even split, sublane-aligned
    return tm, g * tm


@functools.partial(jax.jit, static_argnames=("dims",))
def _ae_forward_impl(x, w1, b1, w2, b2, w3, b3, w4, b4, *, dims):
    n_input, n_enc_1, n_hidden, n_dec_1 = dims
    n = x.shape[0]
    out_dtype = x.dtype                   # outputs in the caller's dtype
    compute_dtype = w1.dtype              # matmul operand dtype (f32 or bf16)

    nin_p, nenc_p = w1.shape
    nhid_p = w2.shape[1]
    ndec_p = w3.shape[1]

    # Batch tiling: big sublane-aligned tiles with minimal row padding.
    tm, n_p = _pick_batch_tile(n)
    grid = (n_p // tm,)

    # Pad batch + features with zeros; cast operands once here (halves x
    # traffic in the bf16 path).
    xp = jnp.pad(x, ((0, n_p - n), (0, nin_p - n_input))).astype(compute_dtype)

    def act_spec(feat):   # batch-tiled activation blocks
        return pl.BlockSpec((tm, feat), lambda i: (i, 0))

    def res_spec(shape):  # VMEM-resident weight / bias blocks (constant index)
        return pl.BlockSpec(shape, lambda i: (0, 0))

    out_shapes = (
        jax.ShapeDtypeStruct((n_p, nin_p), out_dtype),    # x_bar (padded)
        jax.ShapeDtypeStruct((n_p, nenc_p), out_dtype),   # enc_h1 (padded)
        jax.ShapeDtypeStruct((n_p, nhid_p), out_dtype),   # z (padded)
    )

    # Cost estimate (padded shapes = what the kernel actually executes).
    flops = 2 * n_p * (nin_p * nenc_p + nenc_p * nhid_p
                       + nhid_p * ndec_p + ndec_p * nin_p)
    cd_bytes = jnp.dtype(compute_dtype).itemsize
    od_bytes = jnp.dtype(out_dtype).itemsize
    weights_bytes = sum(int(a.size) * a.dtype.itemsize
                        for a in (w1, b1, w2, b2, w3, b3, w4, b4))
    bytes_accessed = (n_p * nin_p * cd_bytes
                      + weights_bytes
                      + n_p * (nin_p + nenc_p + nhid_p) * od_bytes)

    # VMEM budget: resident weights/biases + double-buffered x / x_bar / enc /
    # z tiles (x3 margin) + headroom; capped so v7x (64 MiB physical) is safe.
    tile_bytes = tm * (nin_p * cd_bytes + (nin_p + nenc_p + nhid_p) * od_bytes)
    vmem_need = weights_bytes + 3 * tile_bytes + (2 << 20)
    vmem_limit = int(min(max(vmem_need, 16 << 20), 60 << 20))

    xbar_p, enc_p, z_p = pl.pallas_call(
        ae_forward_kernel,
        grid=grid,
        out_shape=out_shapes,
        in_specs=[
            act_spec(nin_p),                                    # x tile
            res_spec((nin_p, nenc_p)), res_spec((1, nenc_p)),   # W1, b1
            res_spec((nenc_p, nhid_p)), res_spec((1, nhid_p)),  # W2, b2
            res_spec((nhid_p, ndec_p)), res_spec((1, ndec_p)),  # W3, b3
            res_spec((ndec_p, nin_p)), res_spec((1, nin_p)),    # W4, b4
        ],
        out_specs=(act_spec(nin_p), act_spec(nenc_p), act_spec(nhid_p)),
        compiler_params=pltpu.CompilerParams(
            dimension_semantics=("parallel",),   # batch tiles are independent
            vmem_limit_bytes=vmem_limit),
        cost_estimate=pl.CostEstimate(flops=flops, transcendentals=0,
                                      bytes_accessed=bytes_accessed),
    )(xp, w1, b1, w2, b2, w3, b3, w4, b4)

    # Slice padding back off (matches the PyTorch forward exactly).
    return (xbar_p[:n, :n_input], enc_p[:n, :n_enc_1], z_p[:n, :n_hidden])


def ae_forward(x, prepped, dims):
    """x: [batch, n_input]; prepped/dims from prepare_params()."""
    return _ae_forward_impl(x, *prepped, dims=dims)


def init_linear(key, out_features, in_features, dtype=jnp.float32):
    """PyTorch-Linear-style init: uniform(-1/sqrt(in), 1/sqrt(in))."""
    kw, kb = jax.random.split(key)
    bound = 1.0 / jnp.sqrt(jnp.asarray(in_features, dtype))
    w = jax.random.uniform(kw, (out_features, in_features), dtype, -bound, bound)
    b = jax.random.uniform(kb, (out_features,), dtype, -bound, bound)
    return w, b


def reference_forward(x, params):
    """Pure-JAX reference of the PyTorch forward pass."""
    w1, b1 = params["enc_1"]
    w2, b2 = params["class_layer"]
    w3, b3 = params["dec_1"]
    w4, b4 = params["x_bar_layer"]
    enc_h1 = jax.nn.relu(x @ w1.T + b1)
    z = enc_h1 @ w2.T + b2
    dec_h1 = jax.nn.relu(z @ w3.T + b3)
    x_bar = dec_h1 @ w4.T + b4
    return x_bar, enc_h1, z


if __name__ == "__main__":
    # Small shapes consistent with the module (n_enc_1 / n_hidden / n_dec_1
    # are CLI hyperparameters in the original script; chosen synthetically).
    # batch=600 exercises the batch grid (two tiles) and odd-size padding.
    batch = 600
    n_input = 32
    n_enc_1 = 64
    n_hidden = 16
    n_dec_1 = 64

    key = jax.random.PRNGKey(0)
    kx, k1, k2, k3, k4 = jax.random.split(key, 5)

    x = jax.random.normal(kx, (batch, n_input), jnp.float32)
    params = {
        "enc_1": init_linear(k1, n_enc_1, n_input),
        "class_layer": init_linear(k2, n_hidden, n_enc_1),
        "dec_1": init_linear(k3, n_dec_1, n_hidden),
        "x_bar_layer": init_linear(k4, n_input, n_dec_1),
    }

    ref_x_bar, ref_enc_h1, ref_z = reference_forward(x, params)

    # --- f32 operand path (exact parity with the reference) ---
    prepped_f32, dims = prepare_params(params, compute_dtype=jnp.float32)
    x_bar, enc_h1, z = jax.block_until_ready(ae_forward(x, prepped_f32, dims))
    assert x_bar.shape == (batch, n_input)
    assert enc_h1.shape == (batch, n_enc_1)
    assert z.shape == (batch, n_hidden)
    assert jnp.allclose(x_bar, ref_x_bar, atol=1e-5, rtol=1e-5)
    assert jnp.allclose(enc_h1, ref_enc_h1, atol=1e-5, rtol=1e-5)
    assert jnp.allclose(z, ref_z, atol=1e-5, rtol=1e-5)

    # --- bf16 operand / f32 accumulation path (preferred on v6e/v7x) ---
    prepped_bf16, _ = prepare_params(params, compute_dtype=jnp.bfloat16)
    x_bar_b, enc_h1_b, z_b = jax.block_until_ready(ae_forward(x, prepped_bf16, dims))
    assert jnp.allclose(x_bar_b, ref_x_bar, atol=1e-1, rtol=1e-1)
    assert jnp.allclose(enc_h1_b, ref_enc_h1, atol=1e-1, rtol=1e-1)
    assert jnp.allclose(z_b, ref_z, atol=1e-1, rtol=1e-1)

    print("KERNEL_OK")
</pallas_src>

<mosaic_0001>
module attributes {stable_mosaic.version = 11 : i64} {
  func.func @ae_forward_kernel(%arg0: i32, %arg1: memref<304x128xf32, #tpu.memory_space<vmem>>, %arg2: memref<128x128xf32, #tpu.memory_space<vmem>>, %arg3: memref<1x128xf32, #tpu.memory_space<vmem>>, %arg4: memref<128x128xf32, #tpu.memory_space<vmem>>, %arg5: memref<1x128xf32, #tpu.memory_space<vmem>>, %arg6: memref<128x128xf32, #tpu.memory_space<vmem>>, %arg7: memref<1x128xf32, #tpu.memory_space<vmem>>, %arg8: memref<128x128xf32, #tpu.memory_space<vmem>>, %arg9: memref<1x128xf32, #tpu.memory_space<vmem>>, %arg10: memref<304x128xf32, #tpu.memory_space<vmem>>, %arg11: memref<304x128xf32, #tpu.memory_space<vmem>>, %arg12: memref<304x128xf32, #tpu.memory_space<vmem>>) attributes {dimension_semantics = [#tpu.dimension_semantics<parallel>], iteration_bounds = array<i64: 2>, scalar_prefetch = 0 : i64, scratch_operands = 0 : i64, tpu.core_type = #tpu.core_type<tc>, window_params = [{transform_indices = @transform_0, window_bounds = array<i64: 304, 128>}, {pipeline_mode = #tpu.pipeline_mode<synchronous>, transform_indices = @transform_1, window_bounds = array<i64: 128, 128>}, {pipeline_mode = #tpu.pipeline_mode<synchronous>, transform_indices = @transform_2, window_bounds = array<i64: 1, 128>}, {pipeline_mode = #tpu.pipeline_mode<synchronous>, transform_indices = @transform_3, window_bounds = array<i64: 128, 128>}, {pipeline_mode = #tpu.pipeline_mode<synchronous>, transform_indices = @transform_4, window_bounds = array<i64: 1, 128>}, {pipeline_mode = #tpu.pipeline_mode<synchronous>, transform_indices = @transform_5, window_bounds = array<i64: 128, 128>}, {pipeline_mode = #tpu.pipeline_mode<synchronous>, transform_indices = @transform_6, window_bounds = array<i64: 1, 128>}, {pipeline_mode = #tpu.pipeline_mode<synchronous>, transform_indices = @transform_7, window_bounds = array<i64: 128, 128>}, {pipeline_mode = #tpu.pipeline_mode<synchronous>, transform_indices = @transform_8, window_bounds = array<i64: 1, 128>}, {transform_indices = @transform_9, window_bounds = array<i64: 304, 128>}, {transform_indices = @transform_10, window_bounds = array<i64: 304, 128>}, {transform_indices = @transform_11, window_bounds = array<i64: 304, 128>}]} {
    %c0 = arith.constant 0 : index
    %c0_0 = arith.constant 0 : index
    %0 = vector.load %arg1[%c0, %c0_0] : memref<304x128xf32, #tpu.memory_space<vmem>>, vector<304x128xf32>
    %c0_1 = arith.constant 0 : index
    %c0_2 = arith.constant 0 : index
    %1 = vector.load %arg2[%c0_1, %c0_2] : memref<128x128xf32, #tpu.memory_space<vmem>>, vector<128x128xf32>
    %cst = arith.constant dense<0.000000e+00> : vector<304x128xf32>
    %2 = tpu.matmul %0, %1, %cst {dimension_numbers = #tpu.dot_dimension_numbers<[1], [0], [0], [1], [0, 0, 1, 1], [], []>} : vector<304x128xf32>, vector<128x128xf32>, vector<304x128xf32> -> vector<304x128xf32>
    %c0_3 = arith.constant 0 : index
    %c0_4 = arith.constant 0 : index
    %3 = vector.load %arg3[%c0_3, %c0_4] : memref<1x128xf32, #tpu.memory_space<vmem>>, vector<1x128xf32>
    %4 = vector.broadcast %3 : vector<1x128xf32> to vector<304x128xf32>
    %5 = arith.addf %2, %4 : vector<304x128xf32>
    %cst_5 = arith.constant 0.000000e+00 : f32
    %6 = vector.broadcast %cst_5 : f32 to vector<304x128xf32>
    %7 = arith.maximumf %5, %6 : vector<304x128xf32>
    %c0_6 = arith.constant 0 : index
    %c0_7 = arith.constant 0 : index
    %8 = vector.load %arg11[%c0_6, %c0_7] : memref<304x128xf32, #tpu.memory_space<vmem>>, vector<304x128xf32>
    tpu.vector_store %arg11[%c0_6, %c0_7], %7 {strides = array<i32>} : memref<304x128xf32, #tpu.memory_space<vmem>>, vector<304x128xf32>,
    %c0_8 = arith.constant 0 : index
    %c0_9 = arith.constant 0 : index
    %9 = vector.load %arg4[%c0_8, %c0_9] : memref<128x128xf32, #tpu.memory_space<vmem>>, vector<128x128xf32>
    %cst_10 = arith.constant dense<0.000000e+00> : vector<304x128xf32>
    %10 = tpu.matmul %7, %9, %cst_10 {dimension_numbers = #tpu.dot_dimension_numbers<[1], [0], [0], [1], [0, 0, 1, 1], [], []>} : vector<304x128xf32>, vector<128x128xf32>, vector<304x128xf32> -> vector<304x128xf32>
    %c0_11 = arith.constant 0 : index
    %c0_12 = arith.constant 0 : index
    %11 = vector.load %arg5[%c0_11, %c0_12] : memref<1x128xf32, #tpu.memory_space<vmem>>, vector<1x128xf32>
    %12 = vector.broadcast %11 : vector<1x128xf32> to vector<304x128xf32>
    %13 = arith.addf %10, %12 : vector<304x128xf32>
    %c0_13 = arith.constant 0 : index
    %c0_14 = arith.constant 0 : index
    %14 = vector.load %arg12[%c0_13, %c0_14] : memref<304x128xf32, #tpu.memory_space<vmem>>, vector<304x128xf32>
    tpu.vector_store %arg12[%c0_13, %c0_14], %13 {strides = array<i32>} : memref<304x128xf32, #tpu.memory_space<vmem>>, vector<304x128xf32>,
    %c0_15 = arith.constant 0 : index
    %c0_16 = arith.constant 0 : index
    %15 = vector.load %arg6[%c0_15, %c0_16] : memref<128x128xf32, #tpu.memory_space<vmem>>, vector<128x128xf32>
    %cst_17 = arith.constant dense<0.000000e+00> : vector<304x128xf32>
    %16 = tpu.matmul %13, %15, %cst_17 {dimension_numbers = #tpu.dot_dimension_numbers<[1], [0], [0], [1], [0, 0, 1, 1], [], []>} : vector<304x128xf32>, vector<128x128xf32>, vector<304x128xf32> -> vector<304x128xf32>
    %c0_18 = arith.constant 0 : index
    %c0_19 = arith.constant 0 : index
    %17 = vector.load %arg7[%c0_18, %c0_19] : memref<1x128xf32, #tpu.memory_space<vmem>>, vector<1x128xf32>
    %18 = vector.broadcast %17 : vector<1x128xf32> to vector<304x128xf32>
    %19 = arith.addf %16, %18 : vector<304x128xf32>
    %cst_20 = arith.constant 0.000000e+00 : f32
    %20 = vector.broadcast %cst_20 : f32 to vector<304x128xf32>
    %21 = arith.maximumf %19, %20 : vector<304x128xf32>
    %c0_21 = arith.constant 0 : index
    %c0_22 = arith.constant 0 : index
    %22 = vector.load %arg8[%c0_21, %c0_22] : memref<128x128xf32, #tpu.memory_space<vmem>>, vector<128x128xf32>
    %cst_23 = arith.constant dense<0.000000e+00> : vector<304x128xf32>
    %23 = tpu.matmul %21, %22, %cst_23 {dimension_numbers = #tpu.dot_dimension_numbers<[1], [0], [0], [1], [0, 0, 1, 1], [], []>} : vector<304x128xf32>, vector<128x128xf32>, vector<304x128xf32> -> vector<304x128xf32>
    %c0_24 = arith.constant 0 : index
    %c0_25 = arith.constant 0 : index
    %24 = vector.load %arg9[%c0_24, %c0_25] : memref<1x128xf32, #tpu.memory_space<vmem>>, vector<1x128xf32>
    %25 = vector.broadcast %24 : vector<1x128xf32> to vector<304x128xf32>
    %26 = arith.addf %23, %25 : vector<304x128xf32>
    %c0_26 = arith.constant 0 : index
    %c0_27 = arith.constant 0 : index
    %27 = vector.load %arg10[%c0_26, %c0_27] : memref<304x128xf32, #tpu.memory_space<vmem>>, vector<304x128xf32>
    tpu.vector_store %arg10[%c0_26, %c0_27], %26 {strides = array<i32>} : memref<304x128xf32, #tpu.memory_space<vmem>>, vector<304x128xf32>,
    return
  }
  func.func @transform_0(%arg0: i32) -> (i32, i32) {
    %c0_i32 = arith.constant 0 : i32
    %c0_i32_0 = arith.constant 0 : i32
    return %arg0, %c0_i32 : i32, i32
  }
  func.func @transform_1(%arg0: i32) -> (i32, i32) {
    %c0_i32 = arith.constant 0 : i32
    %c0_i32_0 = arith.constant 0 : i32
    %c0_i32_1 = arith.constant 0 : i32
    return %c0_i32, %c0_i32_0 : i32, i32
  }
  func.func @transform_2(%arg0: i32) -> (i32, i32) {
    %c0_i32 = arith.constant 0 : i32
    %c0_i32_0 = arith.constant 0 : i32
    %c0_i32_1 = arith.constant 0 : i32
    return %c0_i32, %c0_i32_0 : i32, i32
  }
  func.func @transform_3(%arg0: i32) -> (i32, i32) {
    %c0_i32 = arith.constant 0 : i32
    %c0_i32_0 = arith.constant 0 : i32
    %c0_i32_1 = arith.constant 0 : i32
    return %c0_i32, %c0_i32_0 : i32, i32
  }
  func.func @transform_4(%arg0: i32) -> (i32, i32) {
    %c0_i32 = arith.constant 0 : i32
    %c0_i32_0 = arith.constant 0 : i32
    %c0_i32_1 = arith.constant 0 : i32
    return %c0_i32, %c0_i32_0 : i32, i32
  }
  func.func @transform_5(%arg0: i32) -> (i32, i32) {
    %c0_i32 = arith.constant 0 : i32
    %c0_i32_0 = arith.constant 0 : i32
    %c0_i32_1 = arith.constant 0 : i32
    return %c0_i32, %c0_i32_0 : i32, i32
  }
  func.func @transform_6(%arg0: i32) -> (i32, i32) {
    %c0_i32 = arith.constant 0 : i32
    %c0_i32_0 = arith.constant 0 : i32
    %c0_i32_1 = arith.constant 0 : i32
    return %c0_i32, %c0_i32_0 : i32, i32
  }
  func.func @transform_7(%arg0: i32) -> (i32, i32) {
    %c0_i32 = arith.constant 0 : i32
    %c0_i32_0 = arith.constant 0 : i32
    %c0_i32_1 = arith.constant 0 : i32
    return %c0_i32, %c0_i32_0 : i32, i32
  }
  func.func @transform_8(%arg0: i32) -> (i32, i32) {
    %c0_i32 = arith.constant 0 : i32
    %c0_i32_0 = arith.constant 0 : i32
    %c0_i32_1 = arith.constant 0 : i32
    return %c0_i32, %c0_i32_0 : i32, i32
  }
  func.func @transform_9(%arg0: i32) -> (i32, i32) {
    %c0_i32 = arith.constant 0 : i32
    %c0_i32_0 = arith.constant 0 : i32
    return %arg0, %c0_i32 : i32, i32
  }
  func.func @transform_10(%arg0: i32) -> (i32, i32) {
    %c0_i32 = arith.constant 0 : i32
    %c0_i32_0 = arith.constant 0 : i32
    return %arg0, %c0_i32 : i32, i32
  }
  func.func @transform_11(%arg0: i32) -> (i32, i32) {
    %c0_i32 = arith.constant 0 : i32
    %c0_i32_0 = arith.constant 0 : i32
    return %arg0, %c0_i32 : i32, i32
  }
}

</mosaic_0001>

<llo_original>
// kernel: _ae_forward_impl.1
$region0: #{_ae_forward_impl.1}
  #allocation0 [shape = 'u32[]', space=smem, size = 0x4, offset = 0x4, fixed_abs, tag = 'smem constant byte address 0x4 - core index']
  #allocation1 [shape = 'u32[144,128]{1,0:T(1,128)}', space=vmem, size = 0x12000, scoped, tag = 'internal scratch']
  %s0 = inlined_call_operand.vmem [shape: f32[608,128], index: 0, kind: input, shape index: {}]
  %s1 = inlined_call_operand.vmem [shape: f32[128,128], index: 1, kind: input, shape index: {}]
  %s2 = inlined_call_operand.vmem [shape: f32[1,128], index: 2, kind: input, shape index: {}]
  %s3 = inlined_call_operand.vmem [shape: f32[128,128], index: 3, kind: input, shape index: {}]
  %s4 = inlined_call_operand.vmem [shape: f32[1,128], index: 4, kind: input, shape index: {}]
  %s5 = inlined_call_operand.vmem [shape: f32[128,128], index: 5, kind: input, shape index: {}]
  %s6 = inlined_call_operand.vmem [shape: f32[1,128], index: 6, kind: input, shape index: {}]
  %s7 = inlined_call_operand.vmem [shape: f32[128,128], index: 7, kind: input, shape index: {}]
  %s8 = inlined_call_operand.vmem [shape: f32[1,128], index: 8, kind: input, shape index: {}]
  %s9 = inlined_call_operand.vmem [shape: f32[608,128], index: 9, kind: output, shape index: {0}]
  %s10 = inlined_call_operand.vmem [shape: f32[608,128], index: 10, kind: output, shape index: {1}]
  %s11 = inlined_call_operand.vmem [shape: f32[608,128], index: 11, kind: output, shape index: {2}]
  %12 = xla_tuple %s9, %s10, %s11
  %s13 = sld [smem:[#allocation0]]
  $region85: #{_ae_forward_impl.1} parent=0
    _
  %s15 = ssub.s32 1, %s13
  %s16 = scalar_select 0, %s15, %s13
  loop: start=0, step=1, limit=4
  $region2: #{_ae_forward_impl.1} parent=0 // loop_pre_header
    _
  $region3: #{_ae_forward_impl.1} parent=0 // loop_header
    %s18 = sphi 0, %s22
    %p19 = scmp.ge.s32.totalorder %s18, 4
    %s28 = sphi 0, %s30
    %s31 = sphi 0, %s28
    %s32 = sphi 0, %s31
    %s48 = sphi 0, %s32
    %s52 = sphi 0, %s52
    %s54 = sphi 0, %s52
    %s55 = sphi 0, %s54
    %s69 = sphi 0, %s55
    %s73 = sphi 0, %s73
    %s75 = sphi 0, %s73
    %s76 = sphi 0, %s75
    %s90 = sphi 0, %s76
    %s94 = sphi 0, %s94
    %s96 = sphi 0, %s94
    %s97 = sphi 0, %s96
    %s111 = sphi 0, %s97
    %s115 = sphi 0, %s115
    %s117 = sphi 0, %s115
    %s118 = sphi 0, %s117
    %s132 = sphi 0, %s118
    %s136 = sphi 0, %s136
    %s138 = sphi 0, %s136
    %s139 = sphi 0, %s138
    %s153 = sphi 0, %s139
    %s157 = sphi 0, %s157
    %s159 = sphi 0, %s157
    %s160 = sphi 0, %s159
    %s174 = sphi 0, %s160
    %s178 = sphi 0, %s178
    %s180 = sphi 0, %s178
    %s181 = sphi 0, %s180
    %s195 = sphi 0, %s181
    %s199 = sphi 0, %s199
    %s201 = sphi 0, %s199
    %s202 = sphi 0, %s201
    %s216 = sphi 0, %s202
    %s222 = sphi 0, %s224
    %s225 = sphi 0, %s222
    %s226 = sphi 0, %s225
    %s242 = sphi 0, %s226
    %s248 = sphi 0, %s250
    %s251 = sphi 0, %s248
    %s252 = sphi 0, %s251
    %s268 = sphi 0, %s252
    %s274 = sphi 0, %s276
    %s277 = sphi 0, %s274
    %s278 = sphi 0, %s277
    %s294 = sphi 0, %s278
  $region4: #{_ae_forward_impl.1} parent=0 // loop_header_branch
    %21 = sbr.rel (%p19) target = $region8
  $region5: #{_ae_forward_impl.1} parent=0 // loop_body
    %s23 = ssub.s32 %s18, 1
    %s24 = ssub.s32 %s18, 2
    %s25 = sadd.s32 %s18, 1
    %s26 = ssub.s32 %s18, %s25
    %p27 = scmp.eq.s32.totalorder %s26, 0
    %s29 = sadd.s32 %s28, 1
    %s30 = scalar_select %p27, %s28, %s29
    %p33 = pneg %p27
    %p34 = scmp.eq.s32.totalorder %s18, 1
    %p35 = por %p33, %p34
    %p36 = scmp.ne.s32.totalorder %s28, %s31
    %p37 = scmp.eq.s32.totalorder %s18, 0
    %p38 = por %p36, %p37
    %p39 = scmp.ne.s32.totalorder %s28, %s31
    %p40 = scmp.eq.s32.totalorder %s23, 1
    %p41 = por %p39, %p40
    %p42 = scmp.ne.s32.totalorder %s31, %s32
    %p43 = scmp.eq.s32.totalorder %s23, 0
    %p44 = por %p42, %p43
    %p45 = scmp.ne.s32.totalorder %s31, %s32
    %p46 = scmp.eq.s32.totalorder %s24, 1
    %p47 = por %p45, %p46
    %p49 = scmp.ne.s32.totalorder %s32, %s48
    %p50 = scmp.eq.s32.totalorder %s24, 0
    %p51 = por %p49, %p50
    %s53 = sadd.s32 %s52, 1
    %p56 = scmp.eq.s32.totalorder %s18, 1
    %p57 = scmp.ne.s32.totalorder %s52, %s54
    %p58 = scmp.eq.s32.totalorder %s18, 0
    %p59 = por %p57, %p58
    %p60 = scmp.ne.s32.totalorder %s52, %s54
    %p61 = scmp.eq.s32.totalorder %s23, 1
    %p62 = por %p60, %p61
    %p63 = scmp.ne.s32.totalorder %s54, %s55
    %p64 = scmp.eq.s32.totalorder %s23, 0
    %p65 = por %p63, %p64
    %p66 = scmp.ne.s32.totalorder %s54, %s55
    %p67 = scmp.eq.s32.totalorder %s24, 1
    %p68 = por %p66, %p67
    %p70 = scmp.ne.s32.totalorder %s55, %s69
    %p71 = scmp.eq.s32.totalorder %s24, 0
    %p72 = por %p70, %p71
    %s74 = sadd.s32 %s73, 1
    %p77 = scmp.eq.s32.totalorder %s18, 1
    %p78 = scmp.ne.s32.totalorder %s73, %s75
    %p79 = scmp.eq.s32.totalorder %s18, 0
    %p80 = por %p78, %p79
    %p81 = scmp.ne.s32.totalorder %s73, %s75
    %p82 = scmp.eq.s32.totalorder %s23, 1
    %p83 = por %p81, %p82
    %p84 = scmp.ne.s32.totalorder %s75, %s76
    %p85 = scmp.eq.s32.totalorder %s23, 0
    %p86 = por %p84, %p85
    %p87 = scmp.ne.s32.totalorder %s75, %s76
    %p88 = scmp.eq.s32.totalorder %s24, 1
    %p89 = por %p87, %p88
    %p91 = scmp.ne.s32.totalorder %s76, %s90
    %p92 = scmp.eq.s32.totalorder %s24, 0
    %p93 = por %p91, %p92
    %s95 = sadd.s32 %s94, 1
    %p98 = scmp.eq.s32.totalorder %s18, 1
    %p99 = scmp.ne.s32.totalorder %s94, %s96
    %p100 = scmp.eq.s32.totalorder %s18, 0
    %p101 = por %p99, %p100
    %p102 = scmp.ne.s32.totalorder %s94, %s96
    %p103 = scmp.eq.s32.totalorder %s23, 1
    %p104 = por %p102, %p103
    %p105 = scmp.ne.s32.totalorder %s96, %s97
    %p106 = scmp.eq.s32.totalorder %s23, 0
    %p107 = por %p105, %p106
    %p108 = scmp.ne.s32.totalorder %s96, %s97
    %p109 = scmp.eq.s32.totalorder %s24, 1
    %p110 = por %p108, %p109
    %p112 = scmp.ne.s32.totalorder %s97, %s111
    %p113 = scmp.eq.s32.totalorder %s24, 0
    %p114 = por %p112, %p113
    %s116 = sadd.s32 %s115, 1
    %p119 = scmp.eq.s32.totalorder %s18, 1
    %p120 = scmp.ne.s32.totalorder %s115, %s117
    %p121 = scmp.eq.s32.totalorder %s18, 0
    %p122 = por %p120, %p121
    %p123 = scmp.ne.s32.totalorder %s115, %s117
    %p124 = scmp.eq.s32.totalorder %s23, 1
    %p125 = por %p123, %p124
    %p126 = scmp.ne.s32.totalorder %s117, %s118
    %p127 = scmp.eq.s32.totalorder %s23, 0
    %p128 = por %p126, %p127
    %p129 = scmp.ne.s32.totalorder %s117, %s118
    %p130 = scmp.eq.s32.totalorder %s24, 1
    %p131 = por %p129, %p130
    %p133 = scmp.ne.s32.totalorder %s118, %s132
    %p134 = scmp.eq.s32.totalorder %s24, 0
    %p135 = por %p133, %p134
    %s137 = sadd.s32 %s136, 1
    %p140 = scmp.eq.s32.totalorder %s18, 1
    %p141 = scmp.ne.s32.totalorder %s136, %s138
    %p142 = scmp.eq.s32.totalorder %s18, 0
    %p143 = por %p141, %p142
    %p144 = scmp.ne.s32.totalorder %s136, %s138
    %p145 = scmp.eq.s32.totalorder %s23, 1
    %p146 = por %p144, %p145
    %p147 = scmp.ne.s32.totalorder %s138, %s139
    %p148 = scmp.eq.s32.totalorder %s23, 0
    %p149 = por %p147, %p148
    %p150 = scmp.ne.s32.totalorder %s138, %s139
    %p151 = scmp.eq.s32.totalorder %s24, 1
    %p152 = por %p150, %p151
    %p154 = scmp.ne.s32.totalorder %s139, %s153
    %p155 = scmp.eq.s32.totalorder %s24, 0
    %p156 = por %p154, %p155
    %s158 = sadd.s32 %s157, 1
    %p161 = scmp.eq.s32.totalorder %s18, 1
    %p162 = scmp.ne.s32.totalorder %s157, %s159
    %p163 = scmp.eq.s32.totalorder %s18, 0
    %p164 = por %p162, %p163
    %p165 = scmp.ne.s32.totalorder %s157, %s159
    %p166 = scmp.eq.s32.totalorder %s23, 1
    %p167 = por %p165, %p166
    %p168 = scmp.ne.s32.totalorder %s159, %s160
    %p169 = scmp.eq.s32.totalorder %s23, 0
    %p170 = por %p168, %p169
    %p171 = scmp.ne.s32.totalorder %s159, %s160
    %p172 = scmp.eq.s32.totalorder %s24, 1
    %p173 = por %p171, %p172
    %p175 = scmp.ne.s32.totalorder %s160, %s174
    %p176 = scmp.eq.s32.totalorder %s24, 0
    %p177 = por %p175, %p176
    %s179 = sadd.s32 %s178, 1
    %p182 = scmp.eq.s32.totalorder %s18, 1
    %p183 = scmp.ne.s32.totalorder %s178, %s180
    %p184 = scmp.eq.s32.totalorder %s18, 0
    %p185 = por %p183, %p184
    %p186 = scmp.ne.s32.totalorder %s178, %s180
    %p187 = scmp.eq.s32.totalorder %s23, 1
    %p188 = por %p186, %p187
    %p189 = scmp.ne.s32.totalorder %s180, %s181
    %p190 = scmp.eq.s32.totalorder %s23, 0
    %p191 = por %p189, %p190
    %p192 = scmp.ne.s32.totalorder %s180, %s181
    %p193 = scmp.eq.s32.totalorder %s24, 1
    %p194 = por %p192, %p193
    %p196 = scmp.ne.s32.totalorder %s181, %s195
    %p197 = scmp.eq.s32.totalorder %s24, 0
    %p198 = por %p196, %p197
    %s200 = sadd.s32 %s199, 1
    %p203 = scmp.eq.s32.totalorder %s18, 1
    %p204 = scmp.ne.s32.totalorder %s199, %s201
    %p205 = scmp.eq.s32.totalorder %s18, 0
    %p206 = por %p204, %p205
    %p207 = scmp.ne.s32.totalorder %s199, %s201
    %p208 = scmp.eq.s32.totalorder %s23, 1
    %p209 = por %p207, %p208
    %p210 = scmp.ne.s32.totalorder %s201, %s202
    %p211 = scmp.eq.s32.totalorder %s23, 0
    %p212 = por %p210, %p211
    %p213 = scmp.ne.s32.totalorder %s201, %s202
    %p214 = scmp.eq.s32.totalorder %s24, 1
    %p215 = por %p213, %p214
    %p217 = scmp.ne.s32.totalorder %s202, %s216
    %p218 = scmp.eq.s32.totalorder %s24, 0
    %p219 = por %p217, %p218
    %s220 = ssub.s32 %s18, %s25
    %p221 = scmp.eq.s32.totalorder %s220, 0
    %s223 = sadd.s32 %s222, 1
    %s224 = scalar_select %p221, %s222, %s223
    %p227 = pneg %p221
    %p228 = scmp.eq.s32.totalorder %s18, 1
    %p229 = por %p227, %p228
    %p230 = scmp.ne.s32.totalorder %s222, %s225
    %p231 = scmp.eq.s32.totalorder %s18, 0
    %p232 = por %p230, %p231
    %p233 = scmp.ne.s32.totalorder %s222, %s225
    %p234 = scmp.eq.s32.totalorder %s23, 1
    %p235 = por %p233, %p234
    %p236 = scmp.ne.s32.totalorder %s225, %s226
    %p237 = scmp.eq.s32.totalorder %s23, 0
    %p238 = por %p236, %p237
    %p239 = scmp.ne.s32.totalorder %s225, %s226
    %p240 = scmp.eq.s32.totalorder %s24, 1
    %p241 = por %p239, %p240
    %p243 = scmp.ne.s32.totalorder %s226, %s242
    %p244 = scmp.eq.s32.totalorder %s24, 0
    %p245 = por %p243, %p244
    %s246 = ssub.s32 %s18, %s25
    %p247 = scmp.eq.s32.totalorder %s246, 0
    %s249 = sadd.s32 %s248, 1
    %s250 = scalar_select %p247, %s248, %s249
    %p253 = pneg %p247
    %p254 = scmp.eq.s32.totalorder %s18, 1
    %p255 = por %p253, %p254
    %p256 = scmp.ne.s32.totalorder %s248, %s251
    %p257 = scmp.eq.s32.totalorder %s18, 0
    %p258 = por %p256, %p257
    %p259 = scmp.ne.s32.totalorder %s248, %s251
    %p260 = scmp.eq.s32.totalorder %s23, 1
    %p261 = por %p259, %p260
    %p262 = scmp.ne.s32.totalorder %s251, %s252
    %p263 = scmp.eq.s32.totalorder %s23, 0
    %p264 = por %p262, %p263
    %p265 = scmp.ne.s32.totalorder %s251, %s252
    %p266 = scmp.eq.s32.totalorder %s24, 1
    %p267 = por %p265, %p266
    %p269 = scmp.ne.s32.totalorder %s252, %s268
    %p270 = scmp.eq.s32.totalorder %s24, 0
    %p271 = por %p269, %p270
    %s272 = ssub.s32 %s18, %s25
    %p273 = scmp.eq.s32.totalorder %s272, 0
    %s275 = sadd.s32 %s274, 1
    %s276 = scalar_select %p273, %s274, %s275
    %p279 = pneg %p273
    %p280 = scmp.eq.s32.totalorder %s18, 1
    %p281 = por %p279, %p280
    %p282 = scmp.ne.s32.totalorder %s274, %s277
    %p283 = scmp.eq.s32.totalorder %s18, 0
    %p284 = por %p282, %p283
    %p285 = scmp.ne.s32.totalorder %s274, %s277
    %p286 = scmp.eq.s32.totalorder %s23, 1
    %p287 = por %p285, %p286
    %p288 = scmp.ne.s32.totalorder %s277, %s278
    %p289 = scmp.eq.s32.totalorder %s23, 0
    %p290 = por %p288, %p289
    %p291 = scmp.ne.s32.totalorder %s277, %s278
    %p292 = scmp.eq.s32.totalorder %s24, 1
    %p293 = por %p291, %p292
    %p295 = scmp.ne.s32.totalorder %s278, %s294
    %p296 = scmp.eq.s32.totalorder %s24, 0
    %p297 = por %p295, %p296
    %p298 = scmp.le.s32.totalorder 1, %s18
    %p299 = scmp.lt.s32.totalorder %s18, 3
    %p300 = pnand %p298, %p299
    %p301 = pneg %p300
    // Predicated region
    $region9: #{_ae_forward_impl.1} parent=5 // pred_check
      _
    $region10: #{_ae_forward_impl.1} parent=5 // pred_check_branch
      %303 = sbr.rel (%p300) target = $region12
    $region11: #{_ae_forward_impl.1} parent=5 // pred_region
      %s304 = ssub.s32 %s18, 1
      // Predicated region
      $region13: #{_ae_forward_impl.1} parent=11 // pred_check
        %p305 = pneg %p65
      $region14: #{_ae_forward_impl.1} parent=11 // pred_check_branch
        %307 = sbr.rel (%p305) target = $region16
      $region15: #{_ae_forward_impl.1} parent=11 // pred_region
        _
      $region16: #{_ae_forward_impl.1} parent=11 // pred_fallthru
        _
      // Predicated region
      $region17: #{_ae_forward_impl.1} parent=11 // pred_check
        %p308 = pneg %p86
      $region18: #{_ae_forward_impl.1} parent=11 // pred_check_branch
        %310 = sbr.rel (%p308) target = $region20
      $region19: #{_ae_forward_impl.1} parent=11 // pred_region
        _
      $region20: #{_ae_forward_impl.1} parent=11 // pred_fallthru
        _
      // Predicated region
      $region21: #{_ae_forward_impl.1} parent=11 // pred_check
        %p311 = pneg %p107
      $region22: #{_ae_forward_impl.1} parent=11 // pred_check_branch
        %313 = sbr.rel (%p311) target = $region24
      $region23: #{_ae_forward_impl.1} parent=11 // pred_region
        _
      $region24: #{_ae_forward_impl.1} parent=11 // pred_fallthru
        _
      // Predicated region
      $region25: #{_ae_forward_impl.1} parent=11 // pred_check
        %p314 = pneg %p128
      $region26: #{_ae_forward_impl.1} parent=11 // pred_check_branch
        %316 = sbr.rel (%p314) target = $region28
      $region27: #{_ae_forward_impl.1} parent=11 // pred_region
        _
      $region28: #{_ae_forward_impl.1} parent=11 // pred_fallthru
        _
      // Predicated region
      $region29: #{_ae_forward_impl.1} parent=11 // pred_check
        %p317 = pneg %p149
      $region30: #{_ae_forward_impl.1} parent=11 // pred_check_branch
        %319 = sbr.rel (%p317) target = $region32
      $region31: #{_ae_forward_impl.1} parent=11 // pred_region
        _
      $region32: #{_ae_forward_impl.1} parent=11 // pred_fallthru
        _
      // Predicated region
      $region33: #{_ae_forward_impl.1} parent=11 // pred_check
        %p320 = pneg %p170
      $region34: #{_ae_forward_impl.1} parent=11 // pred_check_branch
        %322 = sbr.rel (%p320) target = $region36
      $region35: #{_ae_forward_impl.1} parent=11 // pred_region
        _
      $region36: #{_ae_forward_impl.1} parent=11 // pred_fallthru
        _
      // Predicated region
      $region37: #{_ae_forward_impl.1} parent=11 // pred_check
        %p323 = pneg %p191
      $region38: #{_ae_forward_impl.1} parent=11 // pred_check_branch
        %325 = sbr.rel (%p323) target = $region40
      $region39: #{_ae_forward_impl.1} parent=11 // pred_region
        _
      $region40: #{_ae_forward_impl.1} parent=11 // pred_fallthru
        _
      // Predicated region
      $region41: #{_ae_forward_impl.1} parent=11 // pred_check
        %p326 = pneg %p212
      $region42: #{_ae_forward_impl.1} parent=11 // pred_check_branch
        %328 = sbr.rel (%p326) target = $region44
      $region43: #{_ae_forward_impl.1} parent=11 // pred_region
        _
      $region44: #{_ae_forward_impl.1} parent=11 // pred_fallthru
        _
    $region12: #{_ae_forward_impl.1} parent=5 // pred_fallthru
      _
    %p329 = scmp.lt.s32.totalorder %s18, 2
    // Predicated region
    $region45: #{_ae_forward_impl.1} parent=5 // pred_check
      %p330 = pneg %p329
    $region46: #{_ae_forward_impl.1} parent=5 // pred_check_branch
      %332 = sbr.rel (%p330) target = $region48
    $region47: #{_ae_forward_impl.1} parent=5 // pred_region
      // Predicated region
      $region49: #{_ae_forward_impl.1} parent=47 // pred_check
        %p333 = pneg %p38
      $region50: #{_ae_forward_impl.1} parent=47 // pred_check_branch
        %335 = sbr.rel (%p333) target = $region52
      $region51: #{_ae_forward_impl.1} parent=47 // pred_region
        %s336 = smul.u32 38, %s18
        %p337 = scmp.lt.s32.totalorder %s336, 75
        %s338 = scalar_select %p337, %s336, 75
        %s339 = smul.addr %s338, 8
        %s340 = scalar_lea.vmem %s0, %s339
        %s341 = smul.u32 38, %s18
      $region52: #{_ae_forward_impl.1} parent=47 // pred_fallthru
        _
    $region48: #{_ae_forward_impl.1} parent=5 // pred_fallthru
      _
    %p342 = scmp.le.s32.totalorder 1, %s18
    %p343 = scmp.lt.s32.totalorder %s18, 3
    %p344 = pnand %p342, %p343
    %p345 = pneg %p344
    // Predicated region
    $region53: #{_ae_forward_impl.1} parent=5 // pred_check
      _
    $region54: #{_ae_forward_impl.1} parent=5 // pred_check_branch
      %347 = sbr.rel (%p344) target = $region56
    $region55: #{_ae_forward_impl.1} parent=5 // pred_region
      %s348 = ssub.s32 %s18, 1
      %s349 = smul.u32 38, %s23
      %p350 = scmp.lt.s32.totalorder %s349, 75
      %s351 = scalar_select %p350, %s349, 75
      %s352 = smul.addr %s351, 8
      %s353 = scalar_lea.vmem %s0, %s352
      %p354 = pneg %p44
      %p355 = pneg %p41
      %p356 = pneg %p65
      %p357 = pneg %p62
      %p358 = pneg %p86
      %p359 = pneg %p83
      %p360 = pneg %p107
      %p361 = pneg %p104
      %p362 = pneg %p128
      %p363 = pneg %p125
      %p364 = pneg %p149
      %p365 = pneg %p146
      %p366 = pneg %p170
      %p367 = pneg %p167
      %p368 = pneg %p191
      %p369 = pneg %p188
      %p370 = pneg %p212
      %p371 = pneg %p209
      %p372 = pneg %p238
      %p373 = pneg %p235
      %s374 = smul.u32 38, %s23
      %p375 = scmp.lt.s32.totalorder %s374, 75
      %s376 = scalar_select %p375, %s374, 75
      %s377 = smul.addr %s376, 8
      %s378 = scalar_lea.vmem %s9, %s377
      %p379 = pneg %p264
      %p380 = pneg %p261
      %s381 = smul.u32 38, %s23
      %p382 = scmp.lt.s32.totalorder %s381, 75
      %s383 = scalar_select %p382, %s381, 75
      %s384 = smul.addr %s383, 8
      %s385 = scalar_lea.vmem %s10, %s384
      %p386 = pneg %p290
      %p387 = pneg %p287
      %s388 = smul.u32 38, %s23
      %p389 = scmp.lt.s32.totalorder %s388, 75
      %s390 = scalar_select %p389, %s388, 75
      %s391 = smul.addr %s390, 8
      %s392 = scalar_lea.vmem %s11, %s391
      %s393 = smul.u32 38, %s23
      %p394 = scmp.lt.s32.totalorder %s393, 75
      %s395 = scalar_select %p394, %s393, 75
      %s396 = smul.addr %s395, 8
      %s397 = scalar_lea.vmem %s0, %s396
      %s398 = smul.u32 38, %s23
      %s399 = smul.u32 38, %s23
      %p400 = scmp.lt.s32.totalorder %s399, 75
      %s401 = scalar_select %p400, %s399, 75
      %s402 = smul.addr %s401, 8
      %s403 = scalar_lea.vmem %s9, %s402
      %s404 = smul.u32 38, %s23
      %s405 = smul.u32 38, %s23
      %p406 = scmp.lt.s32.totalorder %s405, 75
      %s407 = scalar_select %p406, %s405, 75
      %s408 = smul.addr %s407, 8
      %s409 = scalar_lea.vmem %s10, %s408
      %s410 = smul.u32 38, %s23
      %s411 = smul.u32 38, %s23
      %p412 = scmp.lt.s32.totalorder %s411, 75
      %s413 = scalar_select %p412, %s411, 75
      %s414 = smul.addr %s413, 8
      %s415 = scalar_lea.vmem %s11, %s414
      %s416 = smul.u32 38, %s23
      %v417 = vld [vmem:[%s397] sm:$0xff]
      %v418 = vld [vmem:[%s397 + $0x8] sm:$0xff]
      %v419 = vld [vmem:[%s397 + $0x10] sm:$0xff]
      %v420 = vld [vmem:[%s397 + $0x18] sm:$0xff]
      %v421 = vld [vmem:[%s397 + $0x20] sm:$0xff]
      %v422 = vld [vmem:[%s397 + $0x28] sm:$0xff]
      %v423 = vld [vmem:[%s397 + $0x30] sm:$0xff]
      %v424 = vld [vmem:[%s397 + $0x38] sm:$0xff]
      %v425 = vld [vmem:[%s397 + $0x40] sm:$0xff]
      %v426 = vld [vmem:[%s397 + $0x48] sm:$0xff]
      %v427 = vld [vmem:[%s397 + $0x50] sm:$0xff]
      %v428 = vld [vmem:[%s397 + $0x58] sm:$0xff]
      %v429 = vld [vmem:[%s397 + $0x60] sm:$0xff]
      %v430 = vld [vmem:[%s397 + $0x68] sm:$0xff]
      %v431 = vld [vmem:[%s397 + $0x70] sm:$0xff]
      %v432 = vld [vmem:[%s397 + $0x78] sm:$0xff]
      %v433 = vld [vmem:[%s397 + $0x80] sm:$0xff]
      %v434 = vld [vmem:[%s397 + $0x88] sm:$0xff]
      %v435 = vld [vmem:[%s397 + $0x90] sm:$0xff]
      %v436 = vld [vmem:[%s397 + $0x98] sm:$0xff]
      %v437 = vld [vmem:[%s397 + $0xa0] sm:$0xff]
      %v438 = vld [vmem:[%s397 + $0xa8] sm:$0xff]
      %v439 = vld [vmem:[%s397 + $0xb0] sm:$0xff]
      %v440 = vld [vmem:[%s397 + $0xb8] sm:$0xff]
      %v441 = vld [vmem:[%s397 + $0xc0] sm:$0xff]
      %v442 = vld [vmem:[%s397 + $0xc8] sm:$0xff]
      %v443 = vld [vmem:[%s397 + $0xd0] sm:$0xff]
      %v444 = vld [vmem:[%s397 + $0xd8] sm:$0xff]
      %v445 = vld [vmem:[%s397 + $0xe0] sm:$0xff]
      %v446 = vld [vmem:[%s397 + $0xe8] sm:$0xff]
      %v447 = vld [vmem:[%s397 + $0xf0] sm:$0xff]
      %v448 = vld [vmem:[%s397 + $0xf8] sm:$0xff]
      %v449 = vld [vmem:[%s397 + $0x100] sm:$0xff]
      %v450 = vld [vmem:[%s397 + $0x108] sm:$0xff]
      %v451 = vld [vmem:[%s397 + $0x110] sm:$0xff]
      %v452 = vld [vmem:[%s397 + $0x118] sm:$0xff]
      %v453 = vld [vmem:[%s397 + $0x120] sm:$0xff]
      %v454 = vld [vmem:[%s397 + $0x128] sm:$0xff]
      %v455 = vld [vmem:[%s1] sm:$0xff]
      %v456 = vld [vmem:[%s1 + $0x8] sm:$0xff]
      %v457 = vld [vmem:[%s1 + $0x10] sm:$0xff]
      %v458 = vld [vmem:[%s1 + $0x18] sm:$0xff]
      %v459 = vld [vmem:[%s1 + $0x20] sm:$0xff]
      %v460 = vld [vmem:[%s1 + $0x28] sm:$0xff]
      %v461 = vld [vmem:[%s1 + $0x30] sm:$0xff]
      %v462 = vld [vmem:[%s1 + $0x38] sm:$0xff]
      %v463 = vld [vmem:[%s1 + $0x40] sm:$0xff]
      %v464 = vld [vmem:[%s1 + $0x48] sm:$0xff]
      %v465 = vld [vmem:[%s1 + $0x50] sm:$0xff]
      %v466 = vld [vmem:[%s1 + $0x58] sm:$0xff]
      %v467 = vld [vmem:[%s1 + $0x60] sm:$0xff]
      %v468 = vld [vmem:[%s1 + $0x68] sm:$0xff]
      %v469 = vld [vmem:[%s1 + $0x70] sm:$0xff]
      %v470 = vld [vmem:[%s1 + $0x78] sm:$0xff]
      %v471 = vld [vmem:[%s2] sm:$0x1]
      %v473 = vlaneseq
      %v474 = vshrl.u32 %v473, 7
      %v475 = vsub.s32 0, %v474
      %v476 = vrot.slane %v471, %v475
      %478 = vmatprep.subr.mxu0 0.0
      %479 = vmatpush1.msra.mxu0 %v470
      %480 = vmatprep.subr.mxu0 0.0
      %481 = vmatpush1.msra.mxu0 %v469
      %482 = vmatprep.subr.mxu0 0.0
      %483 = vmatpush1.msra.mxu0 %v468
      %484 = vmatprep.subr.mxu0 0.0
      %485 = vmatpush1.msra.mxu0 %v467
      %486 = vmatprep.subr.mxu0 0.0
      %487 = vmatpush1.msra.mxu0 %v466
      %488 = vmatprep.subr.mxu0 0.0
      %489 = vmatpush1.msra.mxu0 %v465
      %490 = vmatprep.subr.mxu0 0.0
      %491 = vmatpush1.msra.mxu0 %v464
      %492 = vmatprep.subr.mxu0 0.0
      %493 = vmatpush1.msra.mxu0 %v463
      %494 = vmatprep.subr.mxu0 0.0
      %495 = vmatpush1.msra.mxu0 %v462
      %496 = vmatprep.subr.mxu0 0.0
      %497 = vmatpush1.msra.mxu0 %v461
      %498 = vmatprep.subr.mxu0 0.0
      %499 = vmatpush1.msra.mxu0 %v460
      %500 = vmatprep.subr.mxu0 0.0
      %501 = vmatpush1.msra.mxu0 %v459
      %502 = vmatprep.subr.mxu0 0.0
      %503 = vmatpush1.msra.mxu0 %v458
      %504 = vmatprep.subr.mxu0 0.0
      %505 = vmatpush1.msra.mxu0 %v457
      %506 = vmatprep.subr.mxu0 0.0
      %507 = vmatpush1.msra.mxu0 %v456
      %508 = vmatprep.subr.mxu0 0.0
      %509 = vmatpush1.msra.mxu0 %v455
      %510 = vmatprep.subr.mxu0 0.0
      %511 = vmatpush2.msra.mxu0 0.0
      %512 = vmatprep.subr.mxu0 0.0
      %513 = vmatpush2.msra.mxu0 0.0
      %514 = vmatprep.subr.mxu0 0.0
      %515 = vmatpush2.msra.mxu0 0.0
      %516 = vmatprep.subr.mxu0 0.0
      %517 = vmatpush2.msra.mxu0 0.0
      %518 = vmatprep.subr.mxu0 0.0
      %519 = vmatpush2.msra.mxu0 0.0
      %520 = vmatprep.subr.mxu0 0.0
      %521 = vmatpush2.msra.mxu0 0.0
      %522 = vmatprep.subr.mxu0 0.0
      %523 = vmatpush2.msra.mxu0 0.0
      %524 = vmatprep.subr.mxu0 0.0
      %525 = vmatpush2.msra.mxu0 0.0
      %526 = vmatprep.subr.mxu0 0.0
      %527 = vmatpush2.msra.mxu0 0.0
      %528 = vmatprep.subr.mxu0 0.0
      %529 = vmatpush2.msra.mxu0 0.0
      %530 = vmatprep.subr.mxu0 0.0
      %531 = vmatpush2.msra.mxu0 0.0
      %532 = vmatprep.subr.mxu0 0.0
      %533 = vmatpush2.msra.mxu0 0.0
      %534 = vmatprep.subr.mxu0 0.0
      %535 = vmatpush2.msra.mxu0 0.0
      %536 = vmatprep.subr.mxu0 0.0
      %537 = vmatpush2.msra.mxu0 0.0
      %538 = vmatprep.subr.mxu0 0.0
      %539 = vmatpush2.msra.mxu0 0.0
      %540 = vmatprep.subr.mxu0 0.0
      %541 = vmatpush2.msra.mxu0 0.0
      %542 = vmatprep.mubr.f32.mxu0 0.0
      %543 = vmatmul.mubr.f32.gmra.mxu0 %v417
      %v544 = vpop.f32.mrf.mxu0
      %v545 = vadd.f32 %v476, %v544
      %v546 = vpop.f32.mrf.mxu0
      %547 = vmatprep.mubr.f32.mxu0 0.0
      %548 = vmatmul.mubr.f32.gmra.mxu0 %v418
      %v549 = vpop.f32.mrf.mxu0
      %v550 = vadd.f32 %v476, %v549
      %v551 = vpop.f32.mrf.mxu0
      %552 = vmatprep.mubr.f32.mxu0 0.0
      %553 = vmatmul.mubr.f32.gmra.mxu0 %v419
      %v554 = vpop.f32.mrf.mxu0
      %v555 = vadd.f32 %v476, %v554
      %v556 = vpop.f32.mrf.mxu0
      %557 = vmatprep.mubr.f32.mxu0 0.0
      %558 = vmatmul.mubr.f32.gmra.mxu0 %v420
      %v559 = vpop.f32.mrf.mxu0
      %v560 = vadd.f32 %v476, %v559
      %v561 = vpop.f32.mrf.mxu0
      %562 = vmatprep.mubr.f32.mxu0 0.0
      %563 = vmatmul.mubr.f32.gmra.mxu0 %v421
      %v564 = vpop.f32.mrf.mxu0
      %v565 = vadd.f32 %v476, %v564
      %v566 = vpop.f32.mrf.mxu0
      %567 = vmatprep.mubr.f32.mxu0 0.0
      %568 = vmatmul.mubr.f32.gmra.mxu0 %v422
      %v569 = vpop.f32.mrf.mxu0
      %v570 = vadd.f32 %v476, %v569
      %v571 = vpop.f32.mrf.mxu0
      %572 = vmatprep.mubr.f32.mxu0 0.0
      %573 = vmatmul.mubr.f32.gmra.mxu0 %v423
      %v574 = vpop.f32.mrf.mxu0
      %v575 = vadd.f32 %v476, %v574
      %v576 = vpop.f32.mrf.mxu0
      %577 = vmatprep.mubr.f32.mxu0 0.0
      %578 = vmatmul.mubr.f32.gmra.mxu0 %v424
      %v579 = vpop.f32.mrf.mxu0
      %v580 = vadd.f32 %v476, %v579
      %v581 = vpop.f32.mrf.mxu0
      %582 = vmatprep.mubr.f32.mxu0 0.0
      %583 = vmatmul.mubr.f32.gmra.mxu0 %v425
      %v584 = vpop.f32.mrf.mxu0
      %v585 = vadd.f32 %v476, %v584
      %v586 = vpop.f32.mrf.mxu0
      %587 = vmatprep.mubr.f32.mxu0 0.0
      %588 = vmatmul.mubr.f32.gmra.mxu0 %v426
      %v589 = vpop.f32.mrf.mxu0
      %v590 = vadd.f32 %v476, %v589
      %v591 = vpop.f32.mrf.mxu0
      %592 = vmatprep.mubr.f32.mxu0 0.0
      %593 = vmatmul.mubr.f32.gmra.mxu0 %v427
      %v594 = vpop.f32.mrf.mxu0
      %v595 = vadd.f32 %v476, %v594
      %v596 = vpop.f32.mrf.mxu0
      %597 = vmatprep.mubr.f32.mxu0 0.0
      %598 = vmatmul.mubr.f32.gmra.mxu0 %v428
      %v599 = vpop.f32.mrf.mxu0
      %v600 = vadd.f32 %v476, %v599
      %v601 = vpop.f32.mrf.mxu0
      %602 = vmatprep.mubr.f32.mxu0 0.0
      %603 = vmatmul.mubr.f32.gmra.mxu0 %v429
      %v604 = vpop.f32.mrf.mxu0
      %v605 = vadd.f32 %v476, %v604
      %v606 = vpop.f32.mrf.mxu0
      %607 = vmatprep.mubr.f32.mxu0 0.0
      %608 = vmatmul.mubr.f32.gmra.mxu0 %v430
      %v609 = vpop.f32.mrf.mxu0
      %v610 = vadd.f32 %v476, %v609
      %v611 = vpop.f32.mrf.mxu0
      %612 = vmatprep.mubr.f32.mxu0 0.0
      %613 = vmatmul.mubr.f32.gmra.mxu0 %v431
      %v614 = vpop.f32.mrf.mxu0
      %v615 = vadd.f32 %v476, %v614
      %v616 = vpop.f32.mrf.mxu0
      %617 = vmatprep.mubr.f32.mxu0 0.0
      %618 = vmatmul.mubr.f32.gmra.mxu0 %v432
      %v619 = vpop.f32.mrf.mxu0
      %v620 = vadd.f32 %v476, %v619
      %v621 = vpop.f32.mrf.mxu0
      %622 = vmatprep.mubr.f32.mxu0 0.0
      %623 = vmatmul.mubr.f32.gmra.mxu0 %v433
      %v624 = vpop.f32.mrf.mxu0
      %v625 = vadd.f32 %v476, %v624
      %v626 = vpop.f32.mrf.mxu0
      %627 = vmatprep.mubr.f32.mxu0 0.0
      %628 = vmatmul.mubr.f32.gmra.mxu0 %v434
      %v629 = vpop.f32.mrf.mxu0
      %v630 = vadd.f32 %v476, %v629
      %v631 = vpop.f32.mrf.mxu0
      %632 = vmatprep.mubr.f32.mxu0 0.0
      %633 = vmatmul.mubr.f32.gmra.mxu0 %v435
      %v634 = vpop.f32.mrf.mxu0
      %v635 = vadd.f32 %v476, %v634
      %v636 = vpop.f32.mrf.mxu0
      %637 = vmatprep.mubr.f32.mxu0 0.0
      %638 = vmatmul.mubr.f32.gmra.mxu0 %v436
      %v639 = vpop.f32.mrf.mxu0
      %v640 = vadd.f32 %v476, %v639
      %v641 = vpop.f32.mrf.mxu0
      %642 = vmatprep.mubr.f32.mxu0 0.0
      %643 = vmatmul.mubr.f32.gmra.mxu0 %v437
      %v644 = vpop.f32.mrf.mxu0
      %v645 = vadd.f32 %v476, %v644
      %v646 = vpop.f32.mrf.mxu0
      %647 = vmatprep.mubr.f32.mxu0 0.0
      %648 = vmatmul.mubr.f32.gmra.mxu0 %v438
      %v649 = vpop.f32.mrf.mxu0
      %v650 = vadd.f32 %v476, %v649
      %v651 = vpop.f32.mrf.mxu0
      %652 = vmatprep.mubr.f32.mxu0 0.0
      %653 = vmatmul.mubr.f32.gmra.mxu0 %v439
      %v654 = vpop.f32.mrf.mxu0
      %v655 = vadd.f32 %v476, %v654
      %v656 = vpop.f32.mrf.mxu0
      %657 = vmatprep.mubr.f32.mxu0 0.0
      %658 = vmatmul.mubr.f32.gmra.mxu0 %v440
      %v659 = vpop.f32.mrf.mxu0
      %v660 = vadd.f32 %v476, %v659
      %v661 = vpop.f32.mrf.mxu0
      %662 = vmatprep.mubr.f32.mxu0 0.0
      %663 = vmatmul.mubr.f32.gmra.mxu0 %v441
      %v664 = vpop.f32.mrf.mxu0
      %v665 = vadd.f32 %v476, %v664
      %v666 = vpop.f32.mrf.mxu0
      %667 = vmatprep.mubr.f32.mxu0 0.0
      %668 = vmatmul.mubr.f32.gmra.mxu0 %v442
      %v669 = vpop.f32.mrf.mxu0
      %v670 = vadd.f32 %v476, %v669
      %v671 = vpop.f32.mrf.mxu0
      %672 = vmatprep.mubr.f32.mxu0 0.0
      %673 = vmatmul.mubr.f32.gmra.mxu0 %v443
      %v674 = vpop.f32.mrf.mxu0
      %v675 = vadd.f32 %v476, %v674
      %v676 = vpop.f32.mrf.mxu0
      %677 = vmatprep.mubr.f32.mxu0 0.0
      %678 = vmatmul.mubr.f32.gmra.mxu0 %v444
      %v679 = vpop.f32.mrf.mxu0
      %v680 = vadd.f32 %v476, %v679
      %v681 = vpop.f32.mrf.mxu0
      %682 = vmatprep.mubr.f32.mxu0 0.0
      %683 = vmatmul.mubr.f32.gmra.mxu0 %v445
      %v684 = vpop.f32.mrf.mxu0
      %v685 = vadd.f32 %v476, %v684
      %v686 = vpop.f32.mrf.mxu0
      %687 = vmatprep.mubr.f32.mxu0 0.0
      %688 = vmatmul.mubr.f32.gmra.mxu0 %v446
      %v689 = vpop.f32.mrf.mxu0
      %v690 = vadd.f32 %v476, %v689
      %v691 = vpop.f32.mrf.mxu0
      %692 = vmatprep.mubr.f32.mxu0 0.0
      %693 = vmatmul.mubr.f32.gmra.mxu0 %v447
      %v694 = vpop.f32.mrf.mxu0
      %v695 = vadd.f32 %v476, %v694
      %v696 = vpop.f32.mrf.mxu0
      %697 = vmatprep.mubr.f32.mxu0 0.0
      %698 = vmatmul.mubr.f32.gmra.mxu0 %v448
      %v699 = vpop.f32.mrf.mxu0
      %v700 = vadd.f32 %v476, %v699
      %v701 = vpop.f32.mrf.mxu0
      %702 = vmatprep.mubr.f32.mxu0 0.0
      %703 = vmatmul.mubr.f32.gmra.mxu0 %v449
      %v704 = vpop.f32.mrf.mxu0
      %v705 = vadd.f32 %v476, %v704
      %v706 = vpop.f32.mrf.mxu0
      %707 = vmatprep.mubr.f32.mxu0 0.0
      %708 = vmatmul.mubr.f32.gmra.mxu0 %v450
      %v709 = vpop.f32.mrf.mxu0
      %v710 = vadd.f32 %v476, %v709
      %v711 = vpop.f32.mrf.mxu0
      %712 = vmatprep.mubr.f32.mxu0 0.0
      %713 = vmatmul.mubr.f32.gmra.mxu0 %v451
      %v714 = vpop.f32.mrf.mxu0
      %v715 = vadd.f32 %v476, %v714
      %v716 = vpop.f32.mrf.mxu0
      %717 = vmatprep.mubr.f32.mxu0 0.0
      %718 = vmatmul.mubr.f32.gmra.mxu0 %v452
      %v719 = vpop.f32.mrf.mxu0
      %v720 = vadd.f32 %v476, %v719
      %v721 = vpop.f32.mrf.mxu0
      %722 = vmatprep.mubr.f32.mxu0 0.0
      %723 = vmatmul.mubr.f32.gmra.mxu0 %v453
      %v724 = vpop.f32.mrf.mxu0
      %v725 = vadd.f32 %v476, %v724
      %v726 = vpop.f32.mrf.mxu0
      %727 = vmatprep.mubr.f32.mxu0 0.0
      %728 = vmatmul.mubr.f32.gmra.mxu0 %v454
      %v729 = vpop.f32.mrf.mxu0
      %v730 = vadd.f32 %v476, %v729
      %v731 = vpop.f32.mrf.mxu0
      %732 = vdwg.mxu0
      %v733 = vmax.f32 %v545, 0.0
      %v734 = vmax.f32 %v550, 0.0
      %v735 = vmax.f32 %v555, 0.0
      %v736 = vmax.f32 %v560, 0.0
      %v737 = vmax.f32 %v565, 0.0
      %v738 = vmax.f32 %v570, 0.0
      %v739 = vmax.f32 %v575, 0.0
      %v740 = vmax.f32 %v580, 0.0
      %v741 = vmax.f32 %v585, 0.0
      %v742 = vmax.f32 %v590, 0.0
      %v743 = vmax.f32 %v595, 0.0
      %v744 = vmax.f32 %v600, 0.0
      %v745 = vmax.f32 %v605, 0.0
      %v746 = vmax.f32 %v610, 0.0
      %v747 = vmax.f32 %v615, 0.0
      %v748 = vmax.f32 %v620, 0.0
      %v749 = vmax.f32 %v625, 0.0
      %v750 = vmax.f32 %v630, 0.0
      %v751 = vmax.f32 %v635, 0.0
      %v752 = vmax.f32 %v640, 0.0
      %v753 = vmax.f32 %v645, 0.0
      %v754 = vmax.f32 %v650, 0.0
      %v755 = vmax.f32 %v655, 0.0
      %v756 = vmax.f32 %v660, 0.0
      %v757 = vmax.f32 %v665, 0.0
      %v758 = vmax.f32 %v670, 0.0
      %v759 = vmax.f32 %v675, 0.0
      %v760 = vmax.f32 %v680, 0.0
      %v761 = vmax.f32 %v685, 0.0
      %v762 = vmax.f32 %v690, 0.0
      %v763 = vmax.f32 %v695, 0.0
      %v764 = vmax.f32 %v700, 0.0
      %v765 = vmax.f32 %v705, 0.0
      %v766 = vmax.f32 %v710, 0.0
      %v767 = vmax.f32 %v715, 0.0
      %v768 = vmax.f32 %v720, 0.0
      %v769 = vmax.f32 %v725, 0.0
      %v770 = vmax.f32 %v730, 0.0
      %771 = vst [vmem:[%s409] sm:$0xff] %v733
      %772 = vst [vmem:[%s409 + $0x8] sm:$0xff] %v734
      %773 = vst [vmem:[%s409 + $0x10] sm:$0xff] %v735
      %774 = vst [vmem:[%s409 + $0x18] sm:$0xff] %v736
      %775 = vst [vmem:[%s409 + $0x20] sm:$0xff] %v737
      %776 = vst [vmem:[%s409 + $0x28] sm:$0xff] %v738
      %777 = vst [vmem:[%s409 + $0x30] sm:$0xff] %v739
      %778 = vst [vmem:[%s409 + $0x38] sm:$0xff] %v740
      %779 = vst [vmem:[%s409 + $0x40] sm:$0xff] %v741
      %780 = vst [vmem:[%s409 + $0x48] sm:$0xff] %v742
      %781 = vst [vmem:[%s409 + $0x50] sm:$0xff] %v743
      %782 = vst [vmem:[%s409 + $0x58] sm:$0xff] %v744
      %783 = vst [vmem:[%s409 + $0x60] sm:$0xff] %v745
      %784 = vst [vmem:[%s409 + $0x68] sm:$0xff] %v746
      %785 = vst [vmem:[%s409 + $0x70] sm:$0xff] %v747
      %786 = vst [vmem:[%s409 + $0x78] sm:$0xff] %v748
      %787 = vst [vmem:[%s409 + $0x80] sm:$0xff] %v749
      %788 = vst [vmem:[%s409 + $0x88] sm:$0xff] %v750
      %789 = vst [vmem:[%s409 + $0x90] sm:$0xff] %v751
      %790 = vst [vmem:[%s409 + $0x98] sm:$0xff] %v752
      %791 = vst [vmem:[%s409 + $0xa0] sm:$0xff] %v753
      %792 = vst [vmem:[%s409 + $0xa8] sm:$0xff] %v754
      %793 = vst [vmem:[%s409 + $0xb0] sm:$0xff] %v755
      %794 = vst [vmem:[%s409 + $0xb8] sm:$0xff] %v756
      %795 = vst [vmem:[%s409 + $0xc0] sm:$0xff] %v757
      %796 = vst [vmem:[%s409 + $0xc8] sm:$0xff] %v758
      %797 = vst [vmem:[%s409 + $0xd0] sm:$0xff] %v759
      %798 = vst [vmem:[%s409 + $0xd8] sm:$0xff] %v760
      %799 = vst [vmem:[%s409 + $0xe0] sm:$0xff] %v761
      %800 = vst [vmem:[%s409 + $0xe8] sm:$0xff] %v762
      %801 = vst [vmem:[%s409 + $0xf0] sm:$0xff] %v763
      %802 = vst [vmem:[%s409 + $0xf8] sm:$0xff] %v764
      %803 = vst [vmem:[%s409 + $0x100] sm:$0xff] %v765
      %804 = vst [vmem:[%s409 + $0x108] sm:$0xff] %v766
      %805 = vst [vmem:[%s409 + $0x110] sm:$0xff] %v767
      %806 = vst [vmem:[%s409 + $0x118] sm:$0xff] %v768
      %807 = vst [vmem:[%s409 + $0x120] sm:$0xff] %v769
      %808 = vst [vmem:[%s409 + $0x128] sm:$0xff] %v770
      %v809 = vld [vmem:[%s3] sm:$0xff]
      %v810 = vld [vmem:[%s3 + $0x8] sm:$0xff]
      %v811 = vld [vmem:[%s3 + $0x10] sm:$0xff]
      %v812 = vld [vmem:[%s3 + $0x18] sm:$0xff]
      %v813 = vld [vmem:[%s3 + $0x20] sm:$0xff]
      %v814 = vld [vmem:[%s3 + $0x28] sm:$0xff]
      %v815 = vld [vmem:[%s3 + $0x30] sm:$0xff]
      %v816 = vld [vmem:[%s3 + $0x38] sm:$0xff]
      %v817 = vld [vmem:[%s3 + $0x40] sm:$0xff]
      %v818 = vld [vmem:[%s3 + $0x48] sm:$0xff]
      %v819 = vld [vmem:[%s3 + $0x50] sm:$0xff]
      %v820 = vld [vmem:[%s3 + $0x58] sm:$0xff]
      %v821 = vld [vmem:[%s3 + $0x60] sm:$0xff]
      %v822 = vld [vmem:[%s3 + $0x68] sm:$0xff]
      %v823 = vld [vmem:[%s3 + $0x70] sm:$0xff]
      %v824 = vld [vmem:[%s3 + $0x78] sm:$0xff]
      %v825 = vld [vmem:[%s4] sm:$0x1]
      %v827 = vlaneseq
      %v828 = vshrl.u32 %v827, 7
      %v829 = vsub.s32 0, %v828
      %v830 = vrot.slane %v825, %v829
      %832 = vmatprep.subr.mxu0 0.0
      %833 = vmatpush1.msra.mxu0 %v824
      %834 = vmatprep.subr.mxu0 0.0
      %835 = vmatpush1.msra.mxu0 %v823
      %836 = vmatprep.subr.mxu0 0.0
      %837 = vmatpush1.msra.mxu0 %v822
      %838 = vmatprep.subr.mxu0 0.0
      %839 = vmatpush1.msra.mxu0 %v821
      %840 = vmatprep.subr.mxu0 0.0
      %841 = vmatpush1.msra.mxu0 %v820
      %842 = vmatprep.subr.mxu0 0.0
      %843 = vmatpush1.msra.mxu0 %v819
      %844 = vmatprep.subr.mxu0 0.0
      %845 = vmatpush1.msra.mxu0 %v818
      %846 = vmatprep.subr.mxu0 0.0
      %847 = vmatpush1.msra.mxu0 %v817
      %848 = vmatprep.subr.mxu0 0.0
      %849 = vmatpush1.msra.mxu0 %v816
      %850 = vmatprep.subr.mxu0 0.0
      %851 = vmatpush1.msra.mxu0 %v815
      %852 = vmatprep.subr.mxu0 0.0
      %853 = vmatpush1.msra.mxu0 %v814
      %854 = vmatprep.subr.mxu0 0.0
      %855 = vmatpush1.msra.mxu0 %v813
      %856 = vmatprep.subr.mxu0 0.0
      %857 = vmatpush1.msra.mxu0 %v812
      %858 = vmatprep.subr.mxu0 0.0
      %859 = vmatpush1.msra.mxu0 %v811
      %860 = vmatprep.subr.mxu0 0.0
      %861 = vmatpush1.msra.mxu0 %v810
      %862 = vmatprep.subr.mxu0 0.0
      %863 = vmatpush1.msra.mxu0 %v809
      %864 = vmatprep.subr.mxu0 0.0
      %865 = vmatpush2.msra.mxu0 0.0
      %866 = vmatprep.subr.mxu0 0.0
      %867 = vmatpush2.msra.mxu0 0.0
      %868 = vmatprep.subr.mxu0 0.0
      %869 = vmatpush2.msra.mxu0 0.0
      %870 = vmatprep.subr.mxu0 0.0
      %871 = vmatpush2.msra.mxu0 0.0
      %872 = vmatprep.subr.mxu0 0.0
      %873 = vmatpush2.msra.mxu0 0.0
      %874 = vmatprep.subr.mxu0 0.0
      %875 = vmatpush2.msra.mxu0 0.0
      %876 = vmatprep.subr.mxu0 0.0
      %877 = vmatpush2.msra.mxu0 0.0
      %878 = vmatprep.subr.mxu0 0.0
      %879 = vmatpush2.msra.mxu0 0.0
      %880 = vmatprep.subr.mxu0 0.0
      %881 = vmatpush2.msra.mxu0 0.0
      %882 = vmatprep.subr.mxu0 0.0
      %883 = vmatpush2.msra.mxu0 0.0
      %884 = vmatprep.subr.mxu0 0.0
      %885 = vmatpush2.msra.mxu0 0.0
      %886 = vmatprep.subr.mxu0 0.0
      %887 = vmatpush2.msra.mxu0 0.0
      %888 = vmatprep.subr.mxu0 0.0
      %889 = vmatpush2.msra.mxu0 0.0
      %890 = vmatprep.subr.mxu0 0.0
      %891 = vmatpush2.msra.mxu0 0.0
      %892 = vmatprep.subr.mxu0 0.0
      %893 = vmatpush2.msra.mxu0 0.0
      %894 = vmatprep.subr.mxu0 0.0
      %895 = vmatpush2.msra.mxu0 0.0
      %896 = vmatprep.mubr.f32.mxu0 0.0
      %897 = vmatmul.mubr.f32.gmra.mxu0 %v733
      %v898 = vpop.f32.mrf.mxu0
      %v899 = vadd.f32 %v830, %v898
      %v900 = vpop.f32.mrf.mxu0
      %901 = vmatprep.mubr.f32.mxu0 0.0
      %902 = vmatmul.mubr.f32.gmra.mxu0 %v734
      %v903 = vpop.f32.mrf.mxu0
      %v904 = vadd.f32 %v830, %v903
      %v905 = vpop.f32.mrf.mxu0
      %906 = vmatprep.mubr.f32.mxu0 0.0
      %907 = vmatmul.mubr.f32.gmra.mxu0 %v735
      %v908 = vpop.f32.mrf.mxu0
      %v909 = vadd.f32 %v830, %v908
      %v910 = vpop.f32.mrf.mxu0
      %911 = vmatprep.mubr.f32.mxu0 0.0
      %912 = vmatmul.mubr.f32.gmra.mxu0 %v736
      %v913 = vpop.f32.mrf.mxu0
      %v914 = vadd.f32 %v830, %v913
      %v915 = vpop.f32.mrf.mxu0
      %916 = vmatprep.mubr.f32.mxu0 0.0
      %917 = vmatmul.mubr.f32.gmra.mxu0 %v737
      %v918 = vpop.f32.mrf.mxu0
      %v919 = vadd.f32 %v830, %v918
      %v920 = vpop.f32.mrf.mxu0
      %921 = vmatprep.mubr.f32.mxu0 0.0
      %922 = vmatmul.mubr.f32.gmra.mxu0 %v738
      %v923 = vpop.f32.mrf.mxu0
      %v924 = vadd.f32 %v830, %v923
      %v925 = vpop.f32.mrf.mxu0
      %926 = vmatprep.mubr.f32.mxu0 0.0
      %927 = vmatmul.mubr.f32.gmra.mxu0 %v739
      %v928 = vpop.f32.mrf.mxu0
      %v929 = vadd.f32 %v830, %v928
      %v930 = vpop.f32.mrf.mxu0
      %931 = vmatprep.mubr.f32.mxu0 0.0
      %932 = vmatmul.mubr.f32.gmra.mxu0 %v740
      %v933 = vpop.f32.mrf.mxu0
      %v934 = vadd.f32 %v830, %v933
      %v935 = vpop.f32.mrf.mxu0
      %936 = vmatprep.mubr.f32.mxu0 0.0
      %937 = vmatmul.mubr.f32.gmra.mxu0 %v741
      %v938 = vpop.f32.mrf.mxu0
      %v939 = vadd.f32 %v830, %v938
      %v940 = vpop.f32.mrf.mxu0
      %941 = vmatprep.mubr.f32.mxu0 0.0
      %942 = vmatmul.mubr.f32.gmra.mxu0 %v742
      %v943 = vpop.f32.mrf.mxu0
      %v944 = vadd.f32 %v830, %v943
      %v945 = vpop.f32.mrf.mxu0
      %946 = vmatprep.mubr.f32.mxu0 0.0
      %947 = vmatmul.mubr.f32.gmra.mxu0 %v743
      %v948 = vpop.f32.mrf.mxu0
      %v949 = vadd.f32 %v830, %v948
      %v950 = vpop.f32.mrf.mxu0
      %951 = vmatprep.mubr.f32.mxu0 0.0
      %952 = vmatmul.mubr.f32.gmra.mxu0 %v744
      %v953 = vpop.f32.mrf.mxu0
      %v954 = vadd.f32 %v830, %v953
      %v955 = vpop.f32.mrf.mxu0
      %956 = vmatprep.mubr.f32.mxu0 0.0
      %957 = vmatmul.mubr.f32.gmra.mxu0 %v745
      %v958 = vpop.f32.mrf.mxu0
      %v959 = vadd.f32 %v830, %v958
      %v960 = vpop.f32.mrf.mxu0
      %961 = vmatprep.mubr.f32.mxu0 0.0
      %962 = vmatmul.mubr.f32.gmra.mxu0 %v746
      %v963 = vpop.f32.mrf.mxu0
      %v964 = vadd.f32 %v830, %v963
      %v965 = vpop.f32.mrf.mxu0
      %966 = vmatprep.mubr.f32.mxu0 0.0
      %967 = vmatmul.mubr.f32.gmra.mxu0 %v747
      %v968 = vpop.f32.mrf.mxu0
      %v969 = vadd.f32 %v830, %v968
      %v970 = vpop.f32.mrf.mxu0
      %971 = vmatprep.mubr.f32.mxu0 0.0
      %972 = vmatmul.mubr.f32.gmra.mxu0 %v748
      %v973 = vpop.f32.mrf.mxu0
      %v974 = vadd.f32 %v830, %v973
      %v975 = vpop.f32.mrf.mxu0
      %976 = vmatprep.mubr.f32.mxu0 0.0
      %977 = vmatmul.mubr.f32.gmra.mxu0 %v749
      %v978 = vpop.f32.mrf.mxu0
      %v979 = vadd.f32 %v830, %v978
      %v980 = vpop.f32.mrf.mxu0
      %981 = vmatprep.mubr.f32.mxu0 0.0
      %982 = vmatmul.mubr.f32.gmra.mxu0 %v750
      %v983 = vpop.f32.mrf.mxu0
      %v984 = vadd.f32 %v830, %v983
      %v985 = vpop.f32.mrf.mxu0
      %986 = vmatprep.mubr.f32.mxu0 0.0
      %987 = vmatmul.mubr.f32.gmra.mxu0 %v751
      %v988 = vpop.f32.mrf.mxu0
      %v989 = vadd.f32 %v830, %v988
      %v990 = vpop.f32.mrf.mxu0
      %991 = vmatprep.mubr.f32.mxu0 0.0
      %992 = vmatmul.mubr.f32.gmra.mxu0 %v752
      %v993 = vpop.f32.mrf.mxu0
      %v994 = vadd.f32 %v830, %v993
      %v995 = vpop.f32.mrf.mxu0
      %996 = vmatprep.mubr.f32.mxu0 0.0
      %997 = vmatmul.mubr.f32.gmra.mxu0 %v753
      %v998 = vpop.f32.mrf.mxu0
      %v999 = vadd.f32 %v830, %v998
      %v1000 = vpop.f32.mrf.mxu0
      %1001 = vmatprep.mubr.f32.mxu0 0.0
      %1002 = vmatmul.mubr.f32.gmra.mxu0 %v754
      %v1003 = vpop.f32.mrf.mxu0
      %v1004 = vadd.f32 %v830, %v1003
      %v1005 = vpop.f32.mrf.mxu0
      %1006 = vmatprep.mubr.f32.mxu0 0.0
      %1007 = vmatmul.mubr.f32.gmra.mxu0 %v755
      %v1008 = vpop.f32.mrf.mxu0
      %v1009 = vadd.f32 %v830, %v1008
      %v1010 = vpop.f32.mrf.mxu0
      %1011 = vmatprep.mubr.f32.mxu0 0.0
      %1012 = vmatmul.mubr.f32.gmra.mxu0 %v756
      %v1013 = vpop.f32.mrf.mxu0
      %v1014 = vadd.f32 %v830, %v1013
      %v1015 = vpop.f32.mrf.mxu0
      %1016 = vmatprep.mubr.f32.mxu0 0.0
      %1017 = vmatmul.mubr.f32.gmra.mxu0 %v757
      %v1018 = vpop.f32.mrf.mxu0
      %v1019 = vadd.f32 %v830, %v1018
      %v1020 = vpop.f32.mrf.mxu0
      %1021 = vmatprep.mubr.f32.mxu0 0.0
      %1022 = vmatmul.mubr.f32.gmra.mxu0 %v758
      %v1023 = vpop.f32.mrf.mxu0
      %v1024 = vadd.f32 %v830, %v1023
      %v1025 = vpop.f32.mrf.mxu0
      %1026 = vmatprep.mubr.f32.mxu0 0.0
      %1027 = vmatmul.mubr.f32.gmra.mxu0 %v759
      %v1028 = vpop.f32.mrf.mxu0
      %v1029 = vadd.f32 %v830, %v1028
      %v1030 = vpop.f32.mrf.mxu0
      %1031 = vmatprep.mubr.f32.mxu0 0.0
      %1032 = vmatmul.mubr.f32.gmra.mxu0 %v760
      %v1033 = vpop.f32.mrf.mxu0
      %v1034 = vadd.f32 %v830, %v1033
      %v1035 = vpop.f32.mrf.mxu0
      %1036 = vmatprep.mubr.f32.mxu0 0.0
      %1037 = vmatmul.mubr.f32.gmra.mxu0 %v761
      %v1038 = vpop.f32.mrf.mxu0
      %v1039 = vadd.f32 %v830, %v1038
      %v1040 = vpop.f32.mrf.mxu0
      %1041 = vmatprep.mubr.f32.mxu0 0.0
      %1042 = vmatmul.mubr.f32.gmra.mxu0 %v762
      %v1043 = vpop.f32.mrf.mxu0
      %v1044 = vadd.f32 %v830, %v1043
      %v1045 = vpop.f32.mrf.mxu0
      %1046 = vmatprep.mubr.f32.mxu0 0.0
      %1047 = vmatmul.mubr.f32.gmra.mxu0 %v763
      %v1048 = vpop.f32.mrf.mxu0
      %v1049 = vadd.f32 %v830, %v1048
      %v1050 = vpop.f32.mrf.mxu0
      %1051 = vmatprep.mubr.f32.mxu0 0.0
      %1052 = vmatmul.mubr.f32.gmra.mxu0 %v764
      %v1053 = vpop.f32.mrf.mxu0
      %v1054 = vadd.f32 %v830, %v1053
      %v1055 = vpop.f32.mrf.mxu0
      %1056 = vmatprep.mubr.f32.mxu0 0.0
      %1057 = vmatmul.mubr.f32.gmra.mxu0 %v765
      %v1058 = vpop.f32.mrf.mxu0
      %v1059 = vadd.f32 %v830, %v1058
      %v1060 = vpop.f32.mrf.mxu0
      %1061 = vmatprep.mubr.f32.mxu0 0.0
      %1062 = vmatmul.mubr.f32.gmra.mxu0 %v766
      %v1063 = vpop.f32.mrf.mxu0
      %v1064 = vadd.f32 %v830, %v1063
      %v1065 = vpop.f32.mrf.mxu0
      %1066 = vmatprep.mubr.f32.mxu0 0.0
      %1067 = vmatmul.mubr.f32.gmra.mxu0 %v767
      %v1068 = vpop.f32.mrf.mxu0
      %v1069 = vadd.f32 %v830, %v1068
      %v1070 = vpop.f32.mrf.mxu0
      %1071 = vmatprep.mubr.f32.mxu0 0.0
      %1072 = vmatmul.mubr.f32.gmra.mxu0 %v768
      %v1073 = vpop.f32.mrf.mxu0
      %v1074 = vadd.f32 %v830, %v1073
      %v1075 = vpop.f32.mrf.mxu0
      %1076 = vmatprep.mubr.f32.mxu0 0.0
      %1077 = vmatmul.mubr.f32.gmra.mxu0 %v769
      %v1078 = vpop.f32.mrf.mxu0
      %v1079 = vadd.f32 %v830, %v1078
      %v1080 = vpop.f32.mrf.mxu0
      %1081 = vmatprep.mubr.f32.mxu0 0.0
      %1082 = vmatmul.mubr.f32.gmra.mxu0 %v770
      %v1083 = vpop.f32.mrf.mxu0
      %v1084 = vadd.f32 %v830, %v1083
      %v1085 = vpop.f32.mrf.mxu0
      %1086 = vdwg.mxu0
      %1087 = vst [vmem:[%s415] sm:$0xff] %v899
      %1088 = vst [vmem:[%s415 + $0x8] sm:$0xff] %v904
      %1089 = vst [vmem:[%s415 + $0x10] sm:$0xff] %v909
      %1090 = vst [vmem:[%s415 + $0x18] sm:$0xff] %v914
      %1091 = vst [vmem:[%s415 + $0x20] sm:$0xff] %v919
      %1092 = vst [vmem:[%s415 + $0x28] sm:$0xff] %v924
      %1093 = vst [vmem:[%s415 + $0x30] sm:$0xff] %v929
      %1094 = vst [vmem:[%s415 + $0x38] sm:$0xff] %v934
      %1095 = vst [vmem:[%s415 + $0x40] sm:$0xff] %v939
      %1096 = vst [vmem:[%s415 + $0x48] sm:$0xff] %v944
      %1097 = vst [vmem:[%s415 + $0x50] sm:$0xff] %v949
      %1098 = vst [vmem:[%s415 + $0x58] sm:$0xff] %v954
      %1099 = vst [vmem:[%s415 + $0x60] sm:$0xff] %v959
      %1100 = vst [vmem:[%s415 + $0x68] sm:$0xff] %v964
      %1101 = vst [vmem:[%s415 + $0x70] sm:$0xff] %v969
      %1102 = vst [vmem:[%s415 + $0x78] sm:$0xff] %v974
      %1103 = vst [vmem:[%s415 + $0x80] sm:$0xff] %v979
      %1104 = vst [vmem:[%s415 + $0x88] sm:$0xff] %v984
      %1105 = vst [vmem:[%s415 + $0x90] sm:$0xff] %v989
      %1106 = vst [vmem:[%s415 + $0x98] sm:$0xff] %v994
      %1107 = vst [vmem:[%s415 + $0xa0] sm:$0xff] %v999
      %1108 = vst [vmem:[%s415 + $0xa8] sm:$0xff] %v1004
      %1109 = vst [vmem:[%s415 + $0xb0] sm:$0xff] %v1009
      %1110 = vst [vmem:[%s415 + $0xb8] sm:$0xff] %v1014
      %1111 = vst [vmem:[%s415 + $0xc0] sm:$0xff] %v1019
      %1112 = vst [vmem:[%s415 + $0xc8] sm:$0xff] %v1024
      %1113 = vst [vmem:[%s415 + $0xd0] sm:$0xff] %v1029
      %1114 = vst [vmem:[%s415 + $0xd8] sm:$0xff] %v1034
      %1115 = vst [vmem:[%s415 + $0xe0] sm:$0xff] %v1039
      %1116 = vst [vmem:[%s415 + $0xe8] sm:$0xff] %v1044
      %1117 = vst [vmem:[%s415 + $0xf0] sm:$0xff] %v1049
      %1118 = vst [vmem:[%s415 + $0xf8] sm:$0xff] %v1054
      %1119 = vst [vmem:[%s415 + $0x100] sm:$0xff] %v1059
      %1120 = vst [vmem:[%s415 + $0x108] sm:$0xff] %v1064
      %1121 = vst [vmem:[%s415 + $0x110] sm:$0xff] %v1069
      %1122 = vst [vmem:[%s415 + $0x118] sm:$0xff] %v1074
      %1123 = vst [vmem:[%s415 + $0x120] sm:$0xff] %v1079
      %1124 = vst [vmem:[%s415 + $0x128] sm:$0xff] %v1084
      %v1125 = vld [vmem:[%s5] sm:$0xff]
      %v1126 = vld [vmem:[%s5 + $0x8] sm:$0xff]
      %v1127 = vld [vmem:[%s5 + $0x10] sm:$0xff]
      %v1128 = vld [vmem:[%s5 + $0x18] sm:$0xff]
      %v1129 = vld [vmem:[%s5 + $0x20] sm:$0xff]
      %v1130 = vld [vmem:[%s5 + $0x28] sm:$0xff]
      %v1131 = vld [vmem:[%s5 + $0x30] sm:$0xff]
      %v1132 = vld [vmem:[%s5 + $0x38] sm:$0xff]
      %v1133 = vld [vmem:[%s5 + $0x40] sm:$0xff]
      %v1134 = vld [vmem:[%s5 + $0x48] sm:$0xff]
      %v1135 = vld [vmem:[%s5 + $0x50] sm:$0xff]
      %v1136 = vld [vmem:[%s5 + $0x58] sm:$0xff]
      %v1137 = vld [vmem:[%s5 + $0x60] sm:$0xff]
      %v1138 = vld [vmem:[%s5 + $0x68] sm:$0xff]
      %v1139 = vld [vmem:[%s5 + $0x70] sm:$0xff]
      %v1140 = vld [vmem:[%s5 + $0x78] sm:$0xff]
      %v1141 = vld [vmem:[%s6] sm:$0x1]
      %v1143 = vlaneseq
      %v1144 = vshrl.u32 %v1143, 7
      %v1145 = vsub.s32 0, %v1144
      %v1146 = vrot.slane %v1141, %v1145
      %1148 = vmatprep.subr.mxu0 0.0
      %1149 = vmatpush1.msra.mxu0 %v1140
      %1150 = vmatprep.subr.mxu0 0.0
      %1151 = vmatpush1.msra.mxu0 %v1139
      %1152 = vmatprep.subr.mxu0 0.0
      %1153 = vmatpush1.msra.mxu0 %v1138
      %1154 = vmatprep.subr.mxu0 0.0
      %1155 = vmatpush1.msra.mxu0 %v1137
      %1156 = vmatprep.subr.mxu0 0.0
      %1157 = vmatpush1.msra.mxu0 %v1136
      %1158 = vmatprep.subr.mxu0 0.0
      %1159 = vmatpush1.msra.mxu0 %v1135
      %1160 = vmatprep.subr.mxu0 0.0
      %1161 = vmatpush1.msra.mxu0 %v1134
      %1162 = vmatprep.subr.mxu0 0.0
      %1163 = vmatpush1.msra.mxu0 %v1133
      %1164 = vmatprep.subr.mxu0 0.0
      %1165 = vmatpush1.msra.mxu0 %v1132
      %1166 = vmatprep.subr.mxu0 0.0
      %1167 = vmatpush1.msra.mxu0 %v1131
      %1168 = vmatprep.subr.mxu0 0.0
      %1169 = vmatpush1.msra.mxu0 %v1130
      %1170 = vmatprep.subr.mxu0 0.0
      %1171 = vmatpush1.msra.mxu0 %v1129
      %1172 = vmatprep.subr.mxu0 0.0
      %1173 = vmatpush1.msra.mxu0 %v1128
      %1174 = vmatprep.subr.mxu0 0.0
      %1175 = vmatpush1.msra.mxu0 %v1127
      %1176 = vmatprep.subr.mxu0 0.0
      %1177 = vmatpush1.msra.mxu0 %v1126
      %1178 = vmatprep.subr.mxu0 0.0
      %1179 = vmatpush1.msra.mxu0 %v1125
      %1180 = vmatprep.subr.mxu0 0.0
      %1181 = vmatpush2.msra.mxu0 0.0
      %1182 = vmatprep.subr.mxu0 0.0
      %1183 = vmatpush2.msra.mxu0 0.0
      %1184 = vmatprep.subr.mxu0 0.0
      %1185 = vmatpush2.msra.mxu0 0.0
      %1186 = vmatprep.subr.mxu0 0.0
      %1187 = vmatpush2.msra.mxu0 0.0
      %1188 = vmatprep.subr.mxu0 0.0
      %1189 = vmatpush2.msra.mxu0 0.0
      %1190 = vmatprep.subr.mxu0 0.0
      %1191 = vmatpush2.msra.mxu0 0.0
      %1192 = vmatprep.subr.mxu0 0.0
      %1193 = vmatpush2.msra.mxu0 0.0
      %1194 = vmatprep.subr.mxu0 0.0
      %1195 = vmatpush2.msra.mxu0 0.0
      %1196 = vmatprep.subr.mxu0 0.0
      %1197 = vmatpush2.msra.mxu0 0.0
      %1198 = vmatprep.subr.mxu0 0.0
      %1199 = vmatpush2.msra.mxu0 0.0
      %1200 = vmatprep.subr.mxu0 0.0
      %1201 = vmatpush2.msra.mxu0 0.0
      %1202 = vmatprep.subr.mxu0 0.0
      %1203 = vmatpush2.msra.mxu0 0.0
      %1204 = vmatprep.subr.mxu0 0.0
      %1205 = vmatpush2.msra.mxu0 0.0
      %1206 = vmatprep.subr.mxu0 0.0
      %1207 = vmatpush2.msra.mxu0 0.0
      %1208 = vmatprep.subr.mxu0 0.0
      %1209 = vmatpush2.msra.mxu0 0.0
      %1210 = vmatprep.subr.mxu0 0.0
      %1211 = vmatpush2.msra.mxu0 0.0
      %1212 = vmatprep.mubr.f32.mxu0 0.0
      %1213 = vmatmul.mubr.f32.gmra.mxu0 %v899
      %v1214 = vpop.f32.mrf.mxu0
      %v1215 = vadd.f32 %v1146, %v1214
      %v1216 = vpop.f32.mrf.mxu0
      %1217 = vmatprep.mubr.f32.mxu0 0.0
      %1218 = vmatmul.mubr.f32.gmra.mxu0 %v904
      %v1219 = vpop.f32.mrf.mxu0
      %v1220 = vadd.f32 %v1146, %v1219
      %v1221 = vpop.f32.mrf.mxu0
      %1222 = vmatprep.mubr.f32.mxu0 0.0
      %1223 = vmatmul.mubr.f32.gmra.mxu0 %v909
      %v1224 = vpop.f32.mrf.mxu0
      %v1225 = vadd.f32 %v1146, %v1224
      %v1226 = vpop.f32.mrf.mxu0
      %1227 = vmatprep.mubr.f32.mxu0 0.0
      %1228 = vmatmul.mubr.f32.gmra.mxu0 %v914
      %v1229 = vpop.f32.mrf.mxu0
      %v1230 = vadd.f32 %v1146, %v1229
      %v1231 = vpop.f32.mrf.mxu0
      %1232 = vmatprep.mubr.f32.mxu0 0.0
      %1233 = vmatmul.mubr.f32.gmra.mxu0 %v919
      %v1234 = vpop.f32.mrf.mxu0
      %v1235 = vadd.f32 %v1146, %v1234
      %v1236 = vpop.f32.mrf.mxu0
      %1237 = vmatprep.mubr.f32.mxu0 0.0
      %1238 = vmatmul.mubr.f32.gmra.mxu0 %v924
      %v1239 = vpop.f32.mrf.mxu0
      %v1240 = vadd.f32 %v1146, %v1239
      %v1241 = vpop.f32.mrf.mxu0
      %1242 = vmatprep.mubr.f32.mxu0 0.0
      %1243 = vmatmul.mubr.f32.gmra.mxu0 %v929
      %v1244 = vpop.f32.mrf.mxu0
      %v1245 = vadd.f32 %v1146, %v1244
      %v1246 = vpop.f32.mrf.mxu0
      %1247 = vmatprep.mubr.f32.mxu0 0.0
      %1248 = vmatmul.mubr.f32.gmra.mxu0 %v934
      %v1249 = vpop.f32.mrf.mxu0
      %v1250 = vadd.f32 %v1146, %v1249
      %v1251 = vpop.f32.mrf.mxu0
      %1252 = vmatprep.mubr.f32.mxu0 0.0
      %1253 = vmatmul.mubr.f32.gmra.mxu0 %v939
      %v1254 = vpop.f32.mrf.mxu0
      %v1255 = vadd.f32 %v1146, %v1254
      %v1256 = vpop.f32.mrf.mxu0
      %1257 = vmatprep.mubr.f32.mxu0 0.0
      %1258 = vmatmul.mubr.f32.gmra.mxu0 %v944
      %v1259 = vpop.f32.mrf.mxu0
      %v1260 = vadd.f32 %v1146, %v1259
      %v1261 = vpop.f32.mrf.mxu0
      %1262 = vmatprep.mubr.f32.mxu0 0.0
      %1263 = vmatmul.mubr.f32.gmra.mxu0 %v949
      %v1264 = vpop.f32.mrf.mxu0
      %v1265 = vadd.f32 %v1146, %v1264
      %v1266 = vpop.f32.mrf.mxu0
      %1267 = vmatprep.mubr.f32.mxu0 0.0
      %1268 = vmatmul.mubr.f32.gmra.mxu0 %v954
      %v1269 = vpop.f32.mrf.mxu0
      %v1270 = vadd.f32 %v1146, %v1269
      %v1271 = vpop.f32.mrf.mxu0
      %1272 = vmatprep.mubr.f32.mxu0 0.0
      %1273 = vmatmul.mubr.f32.gmra.mxu0 %v959
      %v1274 = vpop.f32.mrf.mxu0
      %v1275 = vadd.f32 %v1146, %v1274
      %v1276 = vpop.f32.mrf.mxu0
      %1277 = vmatprep.mubr.f32.mxu0 0.0
      %1278 = vmatmul.mubr.f32.gmra.mxu0 %v964
      %v1279 = vpop.f32.mrf.mxu0
      %v1280 = vadd.f32 %v1146, %v1279
      %v1281 = vpop.f32.mrf.mxu0
      %1282 = vmatprep.mubr.f32.mxu0 0.0
      %1283 = vmatmul.mubr.f32.gmra.mxu0 %v969
      %v1284 = vpop.f32.mrf.mxu0
      %v1285 = vadd.f32 %v1146, %v1284
      %v1286 = vpop.f32.mrf.mxu0
      %1287 = vmatprep.mubr.f32.mxu0 0.0
      %1288 = vmatmul.mubr.f32.gmra.mxu0 %v974
      %v1289 = vpop.f32.mrf.mxu0
      %v1290 = vadd.f32 %v1146, %v1289
      %v1291 = vpop.f32.mrf.mxu0
      %1292 = vmatprep.mubr.f32.mxu0 0.0
      %1293 = vmatmul.mubr.f32.gmra.mxu0 %v979
      %v1294 = vpop.f32.mrf.mxu0
      %v1295 = vadd.f32 %v1146, %v1294
      %v1296 = vpop.f32.mrf.mxu0
      %1297 = vmatprep.mubr.f32.mxu0 0.0
      %1298 = vmatmul.mubr.f32.gmra.mxu0 %v984
      %v1299 = vpop.f32.mrf.mxu0
      %v1300 = vadd.f32 %v1146, %v1299
      %v1301 = vpop.f32.mrf.mxu0
      %1302 = vmatprep.mubr.f32.mxu0 0.0
      %1303 = vmatmul.mubr.f32.gmra.mxu0 %v989
      %v1304 = vpop.f32.mrf.mxu0
      %v1305 = vadd.f32 %v1146, %v1304
      %v1306 = vpop.f32.mrf.mxu0
      %1307 = vmatprep.mubr.f32.mxu0 0.0
      %1308 = vmatmul.mubr.f32.gmra.mxu0 %v994
      %v1309 = vpop.f32.mrf.mxu0
      %v1310 = vadd.f32 %v1146, %v1309
      %v1311 = vpop.f32.mrf.mxu0
      %1312 = vmatprep.mubr.f32.mxu0 0.0
      %1313 = vmatmul.mubr.f32.gmra.mxu0 %v999
      %v1314 = vpop.f32.mrf.mxu0
      %v1315 = vadd.f32 %v1146, %v1314
      %v1316 = vpop.f32.mrf.mxu0
      %1317 = vmatprep.mubr.f32.mxu0 0.0
      %1318 = vmatmul.mubr.f32.gmra.mxu0 %v1004
      %v1319 = vpop.f32.mrf.mxu0
      %v1320 = vadd.f32 %v1146, %v1319
      %v1321 = vpop.f32.mrf.mxu0
      %1322 = vmatprep.mubr.f32.mxu0 0.0
      %1323 = vmatmul.mubr.f32.gmra.mxu0 %v1009
      %v1324 = vpop.f32.mrf.mxu0
      %v1325 = vadd.f32 %v1146, %v1324
      %v1326 = vpop.f32.mrf.mxu0
      %1327 = vmatprep.mubr.f32.mxu0 0.0
      %1328 = vmatmul.mubr.f32.gmra.mxu0 %v1014
      %v1329 = vpop.f32.mrf.mxu0
      %v1330 = vadd.f32 %v1146, %v1329
      %v1331 = vpop.f32.mrf.mxu0
      %1332 = vmatprep.mubr.f32.mxu0 0.0
      %1333 = vmatmul.mubr.f32.gmra.mxu0 %v1019
      %v1334 = vpop.f32.mrf.mxu0
      %v1335 = vadd.f32 %v1146, %v1334
      %v1336 = vpop.f32.mrf.mxu0
      %1337 = vmatprep.mubr.f32.mxu0 0.0
      %1338 = vmatmul.mubr.f32.gmra.mxu0 %v1024
      %v1339 = vpop.f32.mrf.mxu0
      %v1340 = vadd.f32 %v1146, %v1339
      %v1341 = vpop.f32.mrf.mxu0
      %1342 = vmatprep.mubr.f32.mxu0 0.0
      %1343 = vmatmul.mubr.f32.gmra.mxu0 %v1029
      %v1344 = vpop.f32.mrf.mxu0
      %v1345 = vadd.f32 %v1146, %v1344
      %v1346 = vpop.f32.mrf.mxu0
      %1347 = vmatprep.mubr.f32.mxu0 0.0
      %1348 = vmatmul.mubr.f32.gmra.mxu0 %v1034
      %v1349 = vpop.f32.mrf.mxu0
      %v1350 = vadd.f32 %v1146, %v1349
      %v1351 = vpop.f32.mrf.mxu0
      %1352 = vmatprep.mubr.f32.mxu0 0.0
      %1353 = vmatmul.mubr.f32.gmra.mxu0 %v1039
      %v1354 = vpop.f32.mrf.mxu0
      %v1355 = vadd.f32 %v1146, %v1354
      %v1356 = vpop.f32.mrf.mxu0
      %1357 = vmatprep.mubr.f32.mxu0 0.0
      %1358 = vmatmul.mubr.f32.gmra.mxu0 %v1044
      %v1359 = vpop.f32.mrf.mxu0
      %v1360 = vadd.f32 %v1146, %v1359
      %v1361 = vpop.f32.mrf.mxu0
      %1362 = vmatprep.mubr.f32.mxu0 0.0
      %1363 = vmatmul.mubr.f32.gmra.mxu0 %v1049
      %v1364 = vpop.f32.mrf.mxu0
      %v1365 = vadd.f32 %v1146, %v1364
      %v1366 = vpop.f32.mrf.mxu0
      %1367 = vmatprep.mubr.f32.mxu0 0.0
      %1368 = vmatmul.mubr.f32.gmra.mxu0 %v1054
      %v1369 = vpop.f32.mrf.mxu0
      %v1370 = vadd.f32 %v1146, %v1369
      %v1371 = vpop.f32.mrf.mxu0
      %1372 = vmatprep.mubr.f32.mxu0 0.0
      %1373 = vmatmul.mubr.f32.gmra.mxu0 %v1059
      %v1374 = vpop.f32.mrf.mxu0
      %v1375 = vadd.f32 %v1146, %v1374
      %v1376 = vpop.f32.mrf.mxu0
      %1377 = vmatprep.mubr.f32.mxu0 0.0
      %1378 = vmatmul.mubr.f32.gmra.mxu0 %v1064
      %v1379 = vpop.f32.mrf.mxu0
      %v1380 = vadd.f32 %v1146, %v1379
      %v1381 = vpop.f32.mrf.mxu0
      %1382 = vmatprep.mubr.f32.mxu0 0.0
      %1383 = vmatmul.mubr.f32.gmra.mxu0 %v1069
      %v1384 = vpop.f32.mrf.mxu0
      %v1385 = vadd.f32 %v1146, %v1384
      %v1386 = vpop.f32.mrf.mxu0
      %1387 = vmatprep.mubr.f32.mxu0 0.0
      %1388 = vmatmul.mubr.f32.gmra.mxu0 %v1074
      %v1389 = vpop.f32.mrf.mxu0
      %v1390 = vadd.f32 %v1146, %v1389
      %v1391 = vpop.f32.mrf.mxu0
      %1392 = vmatprep.mubr.f32.mxu0 0.0
      %1393 = vmatmul.mubr.f32.gmra.mxu0 %v1079
      %v1394 = vpop.f32.mrf.mxu0
      %v1395 = vadd.f32 %v1146, %v1394
      %v1396 = vpop.f32.mrf.mxu0
      %1397 = vmatprep.mubr.f32.mxu0 0.0
      %1398 = vmatmul.mubr.f32.gmra.mxu0 %v1084
      %v1399 = vpop.f32.mrf.mxu0
      %v1400 = vadd.f32 %v1146, %v1399
      %v1401 = vpop.f32.mrf.mxu0
      %1402 = vdwg.mxu0
      %v1403 = vmax.f32 %v1215, 0.0
      %v1404 = vmax.f32 %v1220, 0.0
      %v1405 = vmax.f32 %v1225, 0.0
      %v1406 = vmax.f32 %v1230, 0.0
      %v1407 = vmax.f32 %v1235, 0.0
      %v1408 = vmax.f32 %v1240, 0.0
      %v1409 = vmax.f32 %v1245, 0.0
      %v1410 = vmax.f32 %v1250, 0.0
      %v1411 = vmax.f32 %v1255, 0.0
      %v1412 = vmax.f32 %v1260, 0.0
      %v1413 = vmax.f32 %v1265, 0.0
      %v1414 = vmax.f32 %v1270, 0.0
      %v1415 = vmax.f32 %v1275, 0.0
      %v1416 = vmax.f32 %v1280, 0.0
      %v1417 = vmax.f32 %v1285, 0.0
      %v1418 = vmax.f32 %v1290, 0.0
      %v1419 = vmax.f32 %v1295, 0.0
      %v1420 = vmax.f32 %v1300, 0.0
      %v1421 = vmax.f32 %v1305, 0.0
      %v1422 = vmax.f32 %v1310, 0.0
      %v1423 = vmax.f32 %v1315, 0.0
      %v1424 = vmax.f32 %v1320, 0.0
      %v1425 = vmax.f32 %v1325, 0.0
      %v1426 = vmax.f32 %v1330, 0.0
      %v1427 = vmax.f32 %v1335, 0.0
      %v1428 = vmax.f32 %v1340, 0.0
      %v1429 = vmax.f32 %v1345, 0.0
      %v1430 = vmax.f32 %v1350, 0.0
      %v1431 = vmax.f32 %v1355, 0.0
      %v1432 = vmax.f32 %v1360, 0.0
      %v1433 = vmax.f32 %v1365, 0.0
      %v1434 = vmax.f32 %v1370, 0.0
      %v1435 = vmax.f32 %v1375, 0.0
      %v1436 = vmax.f32 %v1380, 0.0
      %v1437 = vmax.f32 %v1385, 0.0
      %v1438 = vmax.f32 %v1390, 0.0
      %v1439 = vmax.f32 %v1395, 0.0
      %v1440 = vmax.f32 %v1400, 0.0
      %v1441 = vld [vmem:[%s7] sm:$0xff]
      %v1442 = vld [vmem:[%s7 + $0x8] sm:$0xff]
      %v1443 = vld [vmem:[%s7 + $0x10] sm:$0xff]
      %v1444 = vld [vmem:[%s7 + $0x18] sm:$0xff]
      %v1445 = vld [vmem:[%s7 + $0x20] sm:$0xff]
      %v1446 = vld [vmem:[%s7 + $0x28] sm:$0xff]
      %v1447 = vld [vmem:[%s7 + $0x30] sm:$0xff]
      %v1448 = vld [vmem:[%s7 + $0x38] sm:$0xff]
      %v1449 = vld [vmem:[%s7 + $0x40] sm:$0xff]
      %v1450 = vld [vmem:[%s7 + $0x48] sm:$0xff]
      %v1451 = vld [vmem:[%s7 + $0x50] sm:$0xff]
      %v1452 = vld [vmem:[%s7 + $0x58] sm:$0xff]
      %v1453 = vld [vmem:[%s7 + $0x60] sm:$0xff]
      %v1454 = vld [vmem:[%s7 + $0x68] sm:$0xff]
      %v1455 = vld [vmem:[%s7 + $0x70] sm:$0xff]
      %v1456 = vld [vmem:[%s7 + $0x78] sm:$0xff]
      %v1457 = vld [vmem:[%s8] sm:$0x1]
      %v1459 = vlaneseq
      %v1460 = vshrl.u32 %v1459, 7
      %v1461 = vsub.s32 0, %v1460
      %v1462 = vrot.slane %v1457, %v1461
      %1464 = vmatprep.subr.mxu0 0.0
      %1465 = vmatpush1.msra.mxu0 %v1456
      %1466 = vmatprep.subr.mxu0 0.0
      %1467 = vmatpush1.msra.mxu0 %v1455
      %1468 = vmatprep.subr.mxu0 0.0
      %1469 = vmatpush1.msra.mxu0 %v1454
      %1470 = vmatprep.subr.mxu0 0.0
      %1471 = vmatpush1.msra.mxu0 %v1453
      %1472 = vmatprep.subr.mxu0 0.0
      %1473 = vmatpush1.msra.mxu0 %v1452
      %1474 = vmatprep.subr.mxu0 0.0
      %1475 = vmatpush1.msra.mxu0 %v1451
      %1476 = vmatprep.subr.mxu0 0.0
      %1477 = vmatpush1.msra.mxu0 %v1450
      %1478 = vmatprep.subr.mxu0 0.0
      %1479 = vmatpush1.msra.mxu0 %v1449
      %1480 = vmatprep.subr.mxu0 0.0
      %1481 = vmatpush1.msra.mxu0 %v1448
      %1482 = vmatprep.subr.mxu0 0.0
      %1483 = vmatpush1.msra.mxu0 %v1447
      %1484 = vmatprep.subr.mxu0 0.0
      %1485 = vmatpush1.msra.mxu0 %v1446
      %1486 = vmatprep.subr.mxu0 0.0
      %1487 = vmatpush1.msra.mxu0 %v1445
      %1488 = vmatprep.subr.mxu0 0.0
      %1489 = vmatpush1.msra.mxu0 %v1444
      %1490 = vmatprep.subr.mxu0 0.0
      %1491 = vmatpush1.msra.mxu0 %v1443
      %1492 = vmatprep.subr.mxu0 0.0
      %1493 = vmatpush1.msra.mxu0 %v1442
      %1494 = vmatprep.subr.mxu0 0.0
      %1495 = vmatpush1.msra.mxu0 %v1441
      %1496 = vmatprep.subr.mxu0 0.0
      %1497 = vmatpush2.msra.mxu0 0.0
      %1498 = vmatprep.subr.mxu0 0.0
      %1499 = vmatpush2.msra.mxu0 0.0
      %1500 = vmatprep.subr.mxu0 0.0
      %1501 = vmatpush2.msra.mxu0 0.0
      %1502 = vmatprep.subr.mxu0 0.0
      %1503 = vmatpush2.msra.mxu0 0.0
      %1504 = vmatprep.subr.mxu0 0.0
      %1505 = vmatpush2.msra.mxu0 0.0
      %1506 = vmatprep.subr.mxu0 0.0
      %1507 = vmatpush2.msra.mxu0 0.0
      %1508 = vmatprep.subr.mxu0 0.0
      %1509 = vmatpush2.msra.mxu0 0.0
      %1510 = vmatprep.subr.mxu0 0.0
      %1511 = vmatpush2.msra.mxu0 0.0
      %1512 = vmatprep.subr.mxu0 0.0
      %1513 = vmatpush2.msra.mxu0 0.0
      %1514 = vmatprep.subr.mxu0 0.0
      %1515 = vmatpush2.msra.mxu0 0.0
      %1516 = vmatprep.subr.mxu0 0.0
      %1517 = vmatpush2.msra.mxu0 0.0
      %1518 = vmatprep.subr.mxu0 0.0
      %1519 = vmatpush2.msra.mxu0 0.0
      %1520 = vmatprep.subr.mxu0 0.0
      %1521 = vmatpush2.msra.mxu0 0.0
      %1522 = vmatprep.subr.mxu0 0.0
      %1523 = vmatpush2.msra.mxu0 0.0
      %1524 = vmatprep.subr.mxu0 0.0
      %1525 = vmatpush2.msra.mxu0 0.0
      %1526 = vmatprep.subr.mxu0 0.0
      %1527 = vmatpush2.msra.mxu0 0.0
      %1528 = vmatprep.mubr.f32.mxu0 0.0
      %1529 = vmatmul.mubr.f32.gmra.mxu0 %v1403
      %v1530 = vpop.f32.mrf.mxu0
      %v1531 = vadd.f32 %v1462, %v1530
      %v1532 = vpop.f32.mrf.mxu0
      %1533 = vmatprep.mubr.f32.mxu0 0.0
      %1534 = vmatmul.mubr.f32.gmra.mxu0 %v1404
      %v1535 = vpop.f32.mrf.mxu0
      %v1536 = vadd.f32 %v1462, %v1535
      %v1537 = vpop.f32.mrf.mxu0
      %1538 = vmatprep.mubr.f32.mxu0 0.0
      %1539 = vmatmul.mubr.f32.gmra.mxu0 %v1405
      %v1540 = vpop.f32.mrf.mxu0
      %v1541 = vadd.f32 %v1462, %v1540
      %v1542 = vpop.f32.mrf.mxu0
      %1543 = vmatprep.mubr.f32.mxu0 0.0
      %1544 = vmatmul.mubr.f32.gmra.mxu0 %v1406
      %v1545 = vpop.f32.mrf.mxu0
      %v1546 = vadd.f32 %v1462, %v1545
      %v1547 = vpop.f32.mrf.mxu0
      %1548 = vmatprep.mubr.f32.mxu0 0.0
      %1549 = vmatmul.mubr.f32.gmra.mxu0 %v1407
      %v1550 = vpop.f32.mrf.mxu0
      %v1551 = vadd.f32 %v1462, %v1550
      %v1552 = vpop.f32.mrf.mxu0
      %1553 = vmatprep.mubr.f32.mxu0 0.0
      %1554 = vmatmul.mubr.f32.gmra.mxu0 %v1408
      %v1555 = vpop.f32.mrf.mxu0
      %v1556 = vadd.f32 %v1462, %v1555
      %v1557 = vpop.f32.mrf.mxu0
      %1558 = vmatprep.mubr.f32.mxu0 0.0
      %1559 = vmatmul.mubr.f32.gmra.mxu0 %v1409
      %v1560 = vpop.f32.mrf.mxu0
      %v1561 = vadd.f32 %v1462, %v1560
      %v1562 = vpop.f32.mrf.mxu0
      %1563 = vmatprep.mubr.f32.mxu0 0.0
      %1564 = vmatmul.mubr.f32.gmra.mxu0 %v1410
      %v1565 = vpop.f32.mrf.mxu0
      %v1566 = vadd.f32 %v1462, %v1565
      %v1567 = vpop.f32.mrf.mxu0
      %1568 = vmatprep.mubr.f32.mxu0 0.0
      %1569 = vmatmul.mubr.f32.gmra.mxu0 %v1411
      %v1570 = vpop.f32.mrf.mxu0
      %v1571 = vadd.f32 %v1462, %v1570
      %v1572 = vpop.f32.mrf.mxu0
      %1573 = vmatprep.mubr.f32.mxu0 0.0
      %1574 = vmatmul.mubr.f32.gmra.mxu0 %v1412
      %v1575 = vpop.f32.mrf.mxu0
      %v1576 = vadd.f32 %v1462, %v1575
      %v1577 = vpop.f32.mrf.mxu0
      %1578 = vmatprep.mubr.f32.mxu0 0.0
      %1579 = vmatmul.mubr.f32.gmra.mxu0 %v1413
      %v1580 = vpop.f32.mrf.mxu0
      %v1581 = vadd.f32 %v1462, %v1580
      %v1582 = vpop.f32.mrf.mxu0
      %1583 = vmatprep.mubr.f32.mxu0 0.0
      %1584 = vmatmul.mubr.f32.gmra.mxu0 %v1414
      %v1585 = vpop.f32.mrf.mxu0
      %v1586 = vadd.f32 %v1462, %v1585
      %v1587 = vpop.f32.mrf.mxu0
      %1588 = vmatprep.mubr.f32.mxu0 0.0
      %1589 = vmatmul.mubr.f32.gmra.mxu0 %v1415
      %v1590 = vpop.f32.mrf.mxu0
      %v1591 = vadd.f32 %v1462, %v1590
      %v1592 = vpop.f32.mrf.mxu0
      %1593 = vmatprep.mubr.f32.mxu0 0.0
      %1594 = vmatmul.mubr.f32.gmra.mxu0 %v1416
      %v1595 = vpop.f32.mrf.mxu0
      %v1596 = vadd.f32 %v1462, %v1595
      %v1597 = vpop.f32.mrf.mxu0
      %1598 = vmatprep.mubr.f32.mxu0 0.0
      %1599 = vmatmul.mubr.f32.gmra.mxu0 %v1417
      %v1600 = vpop.f32.mrf.mxu0
      %v1601 = vadd.f32 %v1462, %v1600
      %v1602 = vpop.f32.mrf.mxu0
      %1603 = vmatprep.mubr.f32.mxu0 0.0
      %1604 = vmatmul.mubr.f32.gmra.mxu0 %v1418
      %v1605 = vpop.f32.mrf.mxu0
      %v1606 = vadd.f32 %v1462, %v1605
      %v1607 = vpop.f32.mrf.mxu0
      %1608 = vmatprep.mubr.f32.mxu0 0.0
      %1609 = vmatmul.mubr.f32.gmra.mxu0 %v1419
      %v1610 = vpop.f32.mrf.mxu0
      %v1611 = vadd.f32 %v1462, %v1610
      %v1612 = vpop.f32.mrf.mxu0
      %1613 = vmatprep.mubr.f32.mxu0 0.0
      %1614 = vmatmul.mubr.f32.gmra.mxu0 %v1420
      %v1615 = vpop.f32.mrf.mxu0
      %v1616 = vadd.f32 %v1462, %v1615
      %v1617 = vpop.f32.mrf.mxu0
      %1618 = vmatprep.mubr.f32.mxu0 0.0
      %1619 = vmatmul.mubr.f32.gmra.mxu0 %v1421
      %v1620 = vpop.f32.mrf.mxu0
      %v1621 = vadd.f32 %v1462, %v1620
      %v1622 = vpop.f32.mrf.mxu0
      %1623 = vmatprep.mubr.f32.mxu0 0.0
      %1624 = vmatmul.mubr.f32.gmra.mxu0 %v1422
      %v1625 = vpop.f32.mrf.mxu0
      %v1626 = vadd.f32 %v1462, %v1625
      %v1627 = vpop.f32.mrf.mxu0
      %1628 = vmatprep.mubr.f32.mxu0 0.0
      %1629 = vmatmul.mubr.f32.gmra.mxu0 %v1423
      %v1630 = vpop.f32.mrf.mxu0
      %v1631 = vadd.f32 %v1462, %v1630
      %v1632 = vpop.f32.mrf.mxu0
      %1633 = vmatprep.mubr.f32.mxu0 0.0
      %1634 = vmatmul.mubr.f32.gmra.mxu0 %v1424
      %v1635 = vpop.f32.mrf.mxu0
      %v1636 = vadd.f32 %v1462, %v1635
      %v1637 = vpop.f32.mrf.mxu0
      %1638 = vmatprep.mubr.f32.mxu0 0.0
      %1639 = vmatmul.mubr.f32.gmra.mxu0 %v1425
      %v1640 = vpop.f32.mrf.mxu0
      %v1641 = vadd.f32 %v1462, %v1640
      %v1642 = vpop.f32.mrf.mxu0
      %1643 = vmatprep.mubr.f32.mxu0 0.0
      %1644 = vmatmul.mubr.f32.gmra.mxu0 %v1426
      %v1645 = vpop.f32.mrf.mxu0
      %v1646 = vadd.f32 %v1462, %v1645
      %v1647 = vpop.f32.mrf.mxu0
      %1648 = vmatprep.mubr.f32.mxu0 0.0
      %1649 = vmatmul.mubr.f32.gmra.mxu0 %v1427
      %v1650 = vpop.f32.mrf.mxu0
      %v1651 = vadd.f32 %v1462, %v1650
      %v1652 = vpop.f32.mrf.mxu0
      %1653 = vmatprep.mubr.f32.mxu0 0.0
      %1654 = vmatmul.mubr.f32.gmra.mxu0 %v1428
      %v1655 = vpop.f32.mrf.mxu0
      %v1656 = vadd.f32 %v1462, %v1655
      %v1657 = vpop.f32.mrf.mxu0
      %1658 = vmatprep.mubr.f32.mxu0 0.0
      %1659 = vmatmul.mubr.f32.gmra.mxu0 %v1429
      %v1660 = vpop.f32.mrf.mxu0
      %v1661 = vadd.f32 %v1462, %v1660
      %v1662 = vpop.f32.mrf.mxu0
      %1663 = vmatprep.mubr.f32.mxu0 0.0
      %1664 = vmatmul.mubr.f32.gmra.mxu0 %v1430
      %v1665 = vpop.f32.mrf.mxu0
      %v1666 = vadd.f32 %v1462, %v1665
      %v1667 = vpop.f32.mrf.mxu0
      %1668 = vmatprep.mubr.f32.mxu0 0.0
      %1669 = vmatmul.mubr.f32.gmra.mxu0 %v1431
      %v1670 = vpop.f32.mrf.mxu0
      %v1671 = vadd.f32 %v1462, %v1670
      %v1672 = vpop.f32.mrf.mxu0
      %1673 = vmatprep.mubr.f32.mxu0 0.0
      %1674 = vmatmul.mubr.f32.gmra.mxu0 %v1432
      %v1675 = vpop.f32.mrf.mxu0
      %v1676 = vadd.f32 %v1462, %v1675
      %v1677 = vpop.f32.mrf.mxu0
      %1678 = vmatprep.mubr.f32.mxu0 0.0
      %1679 = vmatmul.mubr.f32.gmra.mxu0 %v1433
      %v1680 = vpop.f32.mrf.mxu0
      %v1681 = vadd.f32 %v1462, %v1680
      %v1682 = vpop.f32.mrf.mxu0
      %1683 = vmatprep.mubr.f32.mxu0 0.0
      %1684 = vmatmul.mubr.f32.gmra.mxu0 %v1434
      %v1685 = vpop.f32.mrf.mxu0
      %v1686 = vadd.f32 %v1462, %v1685
      %v1687 = vpop.f32.mrf.mxu0
      %1688 = vmatprep.mubr.f32.mxu0 0.0
      %1689 = vmatmul.mubr.f32.gmra.mxu0 %v1435
      %v1690 = vpop.f32.mrf.mxu0
      %v1691 = vadd.f32 %v1462, %v1690
      %v1692 = vpop.f32.mrf.mxu0
      %1693 = vmatprep.mubr.f32.mxu0 0.0
      %1694 = vmatmul.mubr.f32.gmra.mxu0 %v1436
      %v1695 = vpop.f32.mrf.mxu0
      %v1696 = vadd.f32 %v1462, %v1695
      %v1697 = vpop.f32.mrf.mxu0
      %1698 = vmatprep.mubr.f32.mxu0 0.0
      %1699 = vmatmul.mubr.f32.gmra.mxu0 %v1437
      %v1700 = vpop.f32.mrf.mxu0
      %v1701 = vadd.f32 %v1462, %v1700
      %v1702 = vpop.f32.mrf.mxu0
      %1703 = vmatprep.mubr.f32.mxu0 0.0
      %1704 = vmatmul.mubr.f32.gmra.mxu0 %v1438
      %v1705 = vpop.f32.mrf.mxu0
      %v1706 = vadd.f32 %v1462, %v1705
      %v1707 = vpop.f32.mrf.mxu0
      %1708 = vmatprep.mubr.f32.mxu0 0.0
      %1709 = vmatmul.mubr.f32.gmra.mxu0 %v1439
      %v1710 = vpop.f32.mrf.mxu0
      %v1711 = vadd.f32 %v1462, %v1710
      %v1712 = vpop.f32.mrf.mxu0
      %1713 = vmatprep.mubr.f32.mxu0 0.0
      %1714 = vmatmul.mubr.f32.gmra.mxu0 %v1440
      %v1715 = vpop.f32.mrf.mxu0
      %v1716 = vadd.f32 %v1462, %v1715
      %v1717 = vpop.f32.mrf.mxu0
      %1718 = vdwg.mxu0
      %1719 = vst [vmem:[%s403] sm:$0xff] %v1531
      %1720 = vst [vmem:[%s403 + $0x8] sm:$0xff] %v1536
      %1721 = vst [vmem:[%s403 + $0x10] sm:$0xff] %v1541
      %1722 = vst [vmem:[%s403 + $0x18] sm:$0xff] %v1546
      %1723 = vst [vmem:[%s403 + $0x20] sm:$0xff] %v1551
      %1724 = vst [vmem:[%s403 + $0x28] sm:$0xff] %v1556
      %1725 = vst [vmem:[%s403 + $0x30] sm:$0xff] %v1561
      %1726 = vst [vmem:[%s403 + $0x38] sm:$0xff] %v1566
      %1727 = vst [vmem:[%s403 + $0x40] sm:$0xff] %v1571
      %1728 = vst [vmem:[%s403 + $0x48] sm:$0xff] %v1576
      %1729 = vst [vmem:[%s403 + $0x50] sm:$0xff] %v1581
      %1730 = vst [vmem:[%s403 + $0x58] sm:$0xff] %v1586
      %1731 = vst [vmem:[%s403 + $0x60] sm:$0xff] %v1591
      %1732 = vst [vmem:[%s403 + $0x68] sm:$0xff] %v1596
      %1733 = vst [vmem:[%s403 + $0x70] sm:$0xff] %v1601
      %1734 = vst [vmem:[%s403 + $0x78] sm:$0xff] %v1606
      %1735 = vst [vmem:[%s403 + $0x80] sm:$0xff] %v1611
      %1736 = vst [vmem:[%s403 + $0x88] sm:$0xff] %v1616
      %1737 = vst [vmem:[%s403 + $0x90] sm:$0xff] %v1621
      %1738 = vst [vmem:[%s403 + $0x98] sm:$0xff] %v1626
      %1739 = vst [vmem:[%s403 + $0xa0] sm:$0xff] %v1631
      %1740 = vst [vmem:[%s403 + $0xa8] sm:$0xff] %v1636
      %1741 = vst [vmem:[%s403 + $0xb0] sm:$0xff] %v1641
      %1742 = vst [vmem:[%s403 + $0xb8] sm:$0xff] %v1646
      %1743 = vst [vmem:[%s403 + $0xc0] sm:$0xff] %v1651
      %1744 = vst [vmem:[%s403 + $0xc8] sm:$0xff] %v1656
      %1745 = vst [vmem:[%s403 + $0xd0] sm:$0xff] %v1661
      %1746 = vst [vmem:[%s403 + $0xd8] sm:$0xff] %v1666
      %1747 = vst [vmem:[%s403 + $0xe0] sm:$0xff] %v1671
      %1748 = vst [vmem:[%s403 + $0xe8] sm:$0xff] %v1676
      %1749 = vst [vmem:[%s403 + $0xf0] sm:$0xff] %v1681
      %1750 = vst [vmem:[%s403 + $0xf8] sm:$0xff] %v1686
      %1751 = vst [vmem:[%s403 + $0x100] sm:$0xff] %v1691
      %1752 = vst [vmem:[%s403 + $0x108] sm:$0xff] %v1696
      %1753 = vst [vmem:[%s403 + $0x110] sm:$0xff] %v1701
      %1754 = vst [vmem:[%s403 + $0x118] sm:$0xff] %v1706
      %1755 = vst [vmem:[%s403 + $0x120] sm:$0xff] %v1711
      %1756 = vst [vmem:[%s403 + $0x128] sm:$0xff] %v1716
      %s1757 = smul.u32 38, %s23
      %p1758 = scmp.lt.s32.totalorder %s1757, 75
      %s1759 = scalar_select %p1758, %s1757, 75
      %s1760 = smul.addr %s1759, 8
      %s1761 = scalar_lea.vmem %s9, %s1760
      %s1762 = smul.u32 38, %s23
      %p1763 = scmp.lt.s32.totalorder %s1762, 75
      %s1764 = scalar_select %p1763, %s1762, 75
      %s1765 = smul.addr %s1764, 8
      %s1766 = scalar_lea.vmem %s10, %s1765
      %s1767 = smul.u32 38, %s23
      %p1768 = scmp.lt.s32.totalorder %s1767, 75
      %s1769 = scalar_select %p1768, %s1767, 75
      %s1770 = smul.addr %s1769, 8
      %s1771 = scalar_lea.vmem %s11, %s1770
      // Predicated region
      $region57: #{_ae_forward_impl.1} parent=55 // pred_check
        %p1772 = pneg %p235
      $region58: #{_ae_forward_impl.1} parent=55 // pred_check_branch
        %1774 = sbr.rel (%p1772) target = $region60
      $region59: #{_ae_forward_impl.1} parent=55 // pred_region
        %s1775 = smul.u32 38, %s23
      $region60: #{_ae_forward_impl.1} parent=55 // pred_fallthru
        _
      // Predicated region
      $region61: #{_ae_forward_impl.1} parent=55 // pred_check
        %p1776 = pneg %p261
      $region62: #{_ae_forward_impl.1} parent=55 // pred_check_branch
        %1778 = sbr.rel (%p1776) target = $region64
      $region63: #{_ae_forward_impl.1} parent=55 // pred_region
        %s1779 = smul.u32 38, %s23
      $region64: #{_ae_forward_impl.1} parent=55 // pred_fallthru
        _
      // Predicated region
      $region65: #{_ae_forward_impl.1} parent=55 // pred_check
        %p1780 = pneg %p287
      $region66: #{_ae_forward_impl.1} parent=55 // pred_check_branch
        %1782 = sbr.rel (%p1780) target = $region68
      $region67: #{_ae_forward_impl.1} parent=55 // pred_region
        %s1783 = smul.u32 38, %s23
      $region68: #{_ae_forward_impl.1} parent=55 // pred_fallthru
        _
    $region56: #{_ae_forward_impl.1} parent=5 // pred_fallthru
      _
    %p1784 = scmp.le.s32.totalorder 2, %s18
    // Predicated region
    $region69: #{_ae_forward_impl.1} parent=5 // pred_check
      %p1785 = pneg %p1784
    $region70: #{_ae_forward_impl.1} parent=5 // pred_check_branch
      %1787 = sbr.rel (%p1785) target = $region72
    $region71: #{_ae_forward_impl.1} parent=5 // pred_region
      %s1788 = ssub.s32 %s18, 2
      // Predicated region
      $region73: #{_ae_forward_impl.1} parent=71 // pred_check
        %p1789 = pneg %p241
      $region74: #{_ae_forward_impl.1} parent=71 // pred_check_branch
        %1791 = sbr.rel (%p1789) target = $region76
      $region75: #{_ae_forward_impl.1} parent=71 // pred_region
        %s1792 = smul.u32 38, %s24
        %p1793 = scmp.lt.s32.totalorder %s1792, 75
        %s1794 = scalar_select %p1793, %s1792, 75
        %s1795 = smul.addr %s1794, 8
        %s1796 = scalar_lea.vmem %s9, %s1795
      $region76: #{_ae_forward_impl.1} parent=71 // pred_fallthru
        _
      // Predicated region
      $region77: #{_ae_forward_impl.1} parent=71 // pred_check
        %p1797 = pneg %p267
      $region78: #{_ae_forward_impl.1} parent=71 // pred_check_branch
        %1799 = sbr.rel (%p1797) target = $region80
      $region79: #{_ae_forward_impl.1} parent=71 // pred_region
        %s1800 = smul.u32 38, %s24
        %p1801 = scmp.lt.s32.totalorder %s1800, 75
        %s1802 = scalar_select %p1801, %s1800, 75
        %s1803 = smul.addr %s1802, 8
        %s1804 = scalar_lea.vmem %s10, %s1803
      $region80: #{_ae_forward_impl.1} parent=71 // pred_fallthru
        _
      // Predicated region
      $region81: #{_ae_forward_impl.1} parent=71 // pred_check
        %p1805 = pneg %p293
      $region82: #{_ae_forward_impl.1} parent=71 // pred_check_branch
        %1807 = sbr.rel (%p1805) target = $region84
      $region83: #{_ae_forward_impl.1} parent=71 // pred_region
        %s1808 = smul.u32 38, %s24
        %p1809 = scmp.lt.s32.totalorder %s1808, 75
        %s1810 = scalar_select %p1809, %s1808, 75
        %s1811 = smul.addr %s1810, 8
        %s1812 = scalar_lea.vmem %s11, %s1811
      $region84: #{_ae_forward_impl.1} parent=71 // pred_fallthru
        _
    $region72: #{_ae_forward_impl.1} parent=5 // pred_fallthru
      _
  $region6: #{_ae_forward_impl.1} parent=0 // loop_footer
    %s22 = sadd.s32 1, %s18
  $region7: #{_ae_forward_impl.1} parent=0 // loop_footer_branch
    %17 = sbr.rel target = $region3
  $region8: #{_ae_forward_impl.1} parent=0 // loop_exit
    _

</llo_original>
